<compile_context>
chip_gen: v7x
topology: tpu7x:2x2x1
jax: 0.10.0
libtpu: 0.0.40
codegen_flags: <defaults>
</compile_context>

<pallas_src>
import functools

import jax
import jax.numpy as jnp
from jax.experimental import pallas as pl
from jax.experimental.pallas import tpu as pltpu

BN_EPS = 1e-5
LANE = 128
SUBLANE = 8

_VMEM_SPEC = pl.BlockSpec(memory_space=pltpu.MemorySpace.VMEM)


def _round_up(x, m):
    return ((x + m - 1) // m) * m


# ----------------------------------------------------------------------------
# Fused Pallas kernel: entire encoder + reparameterize(eval) + decoder
# ----------------------------------------------------------------------------
def fused_autoencoder_kernel(*refs, relu_flags, mu_layer):
    """refs = (x, w0, b0, ..., w{n-1}, b{n-1}, mu_logvar_out, recon_out).

    Every weight is pre-folded with its BatchNorm (eval mode) and zero-padded
    to [P, P]; every bias is zero-padded to [1, P].  Activations are [B, P].
    """
    n_layers = len(relu_flags)
    x_ref = refs[0]
    wb = refs[1:1 + 2 * n_layers]
    mulv_ref = refs[1 + 2 * n_layers]
    recon_ref = refs[2 + 2 * n_layers]

    a = x_ref[...]
    for li in range(n_layers):
        w = wb[2 * li][...]
        b = wb[2 * li + 1][...]
        a = jnp.dot(a, w, preferred_element_type=jnp.float32) + b
        if relu_flags[li]:
            a = jnp.maximum(a, 0.0)
        if li == mu_layer:
            # merged fc21||fc22 output: cols [0:latent)=mu, [latent:2*latent)=logvar
            mulv_ref[...] = a.astype(mulv_ref.dtype)
            # z = mu (eval-mode reparameterize).  Feeding mu||logvar straight
            # into the decoder is exact because fc3's padded weight has zero
            # rows for every input column >= latent_dim.
    recon_ref[...] = a.astype(recon_ref.dtype)


def autoencoder_forward(fused_wb, x, *, d_in, latent_dim, pad, relu_flags,
                        mu_layer):
    """Runs the fused forward.  Returns (recon, mu, logvar) at true shapes."""
    B = x.shape[0]
    Bp = _round_up(B, SUBLANE)
    x_pad = jnp.pad(x.astype(jnp.float32),
                    ((0, Bp - B), (0, pad - x.shape[1])))

    kernel = functools.partial(fused_autoencoder_kernel,
                               relu_flags=relu_flags, mu_layer=mu_layer)
    mulv_pad, recon_pad = pl.pallas_call(
        kernel,
        out_shape=(jax.ShapeDtypeStruct((Bp, pad), jnp.float32),   # mu||logvar
                   jax.ShapeDtypeStruct((Bp, pad), jnp.float32)),  # recon
        in_specs=[_VMEM_SPEC] * (1 + len(fused_wb)),
        out_specs=(_VMEM_SPEC, _VMEM_SPEC),
    )(x_pad, *fused_wb)

    recon = recon_pad[:B, :d_in]
    mu = mulv_pad[:B, :latent_dim]
    logvar = mulv_pad[:B, latent_dim:2 * latent_dim]
    return recon, mu, logvar


# ----------------------------------------------------------------------------
# Parameter construction (deterministic, PyTorch-style init + synthetic BN stats)
# ----------------------------------------------------------------------------
def make_linear_params(key, fan_in, fan_out):
    kw, kb = jax.random.split(key)
    bound = 1.0 / jnp.sqrt(float(fan_in))
    # stored pre-transposed: [in, out]
    wt = jax.random.uniform(kw, (fan_in, fan_out), jnp.float32, -bound, bound)
    b = jax.random.uniform(kb, (1, fan_out), jnp.float32, -bound, bound)
    return wt, b


def make_bn_params(key, feat):
    kg, kb, km, kv = jax.random.split(key, 4)
    gamma = jax.random.uniform(kg, (1, feat), jnp.float32, 0.5, 1.5)
    beta = 0.1 * jax.random.normal(kb, (1, feat), jnp.float32)
    rm = 0.1 * jax.random.normal(km, (1, feat), jnp.float32)
    rv = jax.random.uniform(kv, (1, feat), jnp.float32, 0.5, 1.5)
    return gamma, beta, rm, rv


def make_linear_bn(key, fan_in, fan_out):
    k1, k2 = jax.random.split(key)
    return make_linear_params(k1, fan_in, fan_out) + make_bn_params(k2, fan_out)


def build_autoencoder_params(key, d_in, h, latent_dim):
    keys = jax.random.split(key, 16)
    p = {}
    # encoder
    p["lin1"] = make_linear_bn(keys[0], d_in, h[0])           # linear1 + lin_bn1
    p["hidden_in"] = [make_linear_bn(keys[1], h[0], h[1])]    # linear2 + lin_bn2
    p["lin3"] = make_linear_bn(keys[2], h[-1], h[-1])         # linear3 + lin_bn3
    p["fc1"] = make_linear_bn(keys[3], h[-1], latent_dim)     # fc1 + bn1
    p["fc21"] = make_linear_params(keys[4], latent_dim, latent_dim)
    p["fc22"] = make_linear_params(keys[5], latent_dim, latent_dim)
    # decoder
    p["fc3"] = make_linear_bn(keys[6], latent_dim, latent_dim)   # fc3 + fc_bn3
    p["fc4"] = make_linear_bn(keys[7], latent_dim, h[-1])        # fc4 + fc_bn4
    p["lin4"] = make_linear_bn(keys[8], h[-1], h[-1])            # linear4 + lin_bn4
    p["hidden_out"] = [make_linear_bn(keys[9], h[1], h[0])]      # linear5 + lin_bn5
    p["lin6"] = make_linear_bn(keys[10], h[0], d_in)             # linear6 + lin_bn6
    return p


# ----------------------------------------------------------------------------
# BN folding + zero padding into kernel-ready fused parameters
# ----------------------------------------------------------------------------
def _fold_bn(params):
    wt, b, g, beta, rm, rv = params
    scale = g / jnp.sqrt(rv + BN_EPS)          # [1, out]
    return wt * scale, (b - rm) * scale + beta  # exact eval-mode BN fold (f32)


def _pad_wb(w, b, pad):
    fin, fout = w.shape
    w_p = jnp.zeros((pad, pad), jnp.float32).at[:fin, :fout].set(w)
    b_p = jnp.zeros((1, pad), jnp.float32).at[:, :fout].set(b)
    return w_p, b_p


def build_fused_params(p, latent_dim):
    """Returns (flat (w,b,...) tuple, pad width, relu flags, mu-layer index)."""
    layers = []
    relu = []

    def add(wb, apply_relu):
        layers.append(wb)
        relu.append(apply_relu)

    add(_fold_bn(p["lin1"]), True)
    for layer in p["hidden_in"]:
        add(_fold_bn(layer), True)
    add(_fold_bn(p["lin3"]), True)
    add(_fold_bn(p["fc1"]), True)
    # merged fc21 || fc22 (shared input, one MXU push)
    w21, b21 = p["fc21"]
    w22, b22 = p["fc22"]
    mu_layer = len(layers)
    add((jnp.concatenate([w21, w22], axis=1),
         jnp.concatenate([b21, b22], axis=1)), False)
    add(_fold_bn(p["fc3"]), True)
    add(_fold_bn(p["fc4"]), True)
    add(_fold_bn(p["lin4"]), True)
    for layer in p["hidden_out"]:
        add(_fold_bn(layer), True)
    add(_fold_bn(p["lin6"]), False)

    max_feat = max(max(w.shape) for w, _ in layers)
    pad = _round_up(max(max_feat, LANE), LANE)

    flat = []
    for w, b in layers:
        w_p, b_p = _pad_wb(w, b, pad)
        flat.extend([w_p, b_p])
    return tuple(flat), pad, tuple(relu), mu_layer


# ----------------------------------------------------------------------------
# Pure-JAX reference (unfolded params) for correctness check
# ----------------------------------------------------------------------------
def _ref_linear_bn(x, params, apply_relu):
    wt, b, g, beta, rm, rv = params
    y = x @ wt + b
    y = (y - rm) / jnp.sqrt(rv + BN_EPS) * g + beta
    return jnp.maximum(y, 0.0) if apply_relu else y


def _ref_linear(x, params):
    wt, b = params
    return x @ wt + b


def reference_forward(params, x):
    h = _ref_linear_bn(x, params["lin1"], True)
    for layer in params["hidden_in"]:
        h = _ref_linear_bn(h, layer, True)
    h = _ref_linear_bn(h, params["lin3"], True)
    h = _ref_linear_bn(h, params["fc1"], True)
    mu = _ref_linear(h, params["fc21"])
    logvar = _ref_linear(h, params["fc22"])
    z = mu
    d = _ref_linear_bn(z, params["fc3"], True)
    d = _ref_linear_bn(d, params["fc4"], True)
    d = _ref_linear_bn(d, params["lin4"], True)
    for layer in params["hidden_out"]:
        d = _ref_linear_bn(d, layer, True)
    recon = _ref_linear_bn(d, params["lin6"], False)
    return recon, mu, logvar


# ----------------------------------------------------------------------------
if __name__ == "__main__":
    D_IN = 16
    H = [64, 32]
    LATENT = 2
    BATCH = 8

    key = jax.random.PRNGKey(0)
    k_params, k_x = jax.random.split(key)
    params = build_autoencoder_params(k_params, D_IN, H, LATENT)
    fused_wb, pad, relu_flags, mu_layer = build_fused_params(params, LATENT)
    x = jax.random.normal(k_x, (BATCH, D_IN), jnp.float32)

    fwd = jax.jit(functools.partial(
        autoencoder_forward, d_in=D_IN, latent_dim=LATENT, pad=pad,
        relu_flags=relu_flags, mu_layer=mu_layer))

    recon, mu, logvar = fwd(fused_wb, x)
    jax.block_until_ready((recon, mu, logvar))

    r_ref, mu_ref, lv_ref = reference_forward(params, x)
    assert recon.shape == (BATCH, D_IN)
    assert mu.shape == (BATCH, LATENT) and logvar.shape == (BATCH, LATENT)
    assert jnp.allclose(recon, r_ref, atol=2e-3, rtol=2e-3)
    assert jnp.allclose(mu, mu_ref, atol=2e-3, rtol=2e-3)
    assert jnp.allclose(logvar, lv_ref, atol=2e-3, rtol=2e-3)

    print("KERNEL_OK")
</pallas_src>

<mosaic_0001>
module attributes {stable_mosaic.version = 11 : i64} {
  func.func @fused_autoencoder_kernel(%arg0: memref<8x128xf32, #tpu.memory_space<vmem>>, %arg1: memref<128x128xf32, #tpu.memory_space<vmem>>, %arg2: memref<1x128xf32, #tpu.memory_space<vmem>>, %arg3: memref<128x128xf32, #tpu.memory_space<vmem>>, %arg4: memref<1x128xf32, #tpu.memory_space<vmem>>, %arg5: memref<128x128xf32, #tpu.memory_space<vmem>>, %arg6: memref<1x128xf32, #tpu.memory_space<vmem>>, %arg7: memref<128x128xf32, #tpu.memory_space<vmem>>, %arg8: memref<1x128xf32, #tpu.memory_space<vmem>>, %arg9: memref<128x128xf32, #tpu.memory_space<vmem>>, %arg10: memref<1x128xf32, #tpu.memory_space<vmem>>, %arg11: memref<128x128xf32, #tpu.memory_space<vmem>>, %arg12: memref<1x128xf32, #tpu.memory_space<vmem>>, %arg13: memref<128x128xf32, #tpu.memory_space<vmem>>, %arg14: memref<1x128xf32, #tpu.memory_space<vmem>>, %arg15: memref<128x128xf32, #tpu.memory_space<vmem>>, %arg16: memref<1x128xf32, #tpu.memory_space<vmem>>, %arg17: memref<128x128xf32, #tpu.memory_space<vmem>>, %arg18: memref<1x128xf32, #tpu.memory_space<vmem>>, %arg19: memref<128x128xf32, #tpu.memory_space<vmem>>, %arg20: memref<1x128xf32, #tpu.memory_space<vmem>>, %arg21: memref<8x128xf32, #tpu.memory_space<vmem>>, %arg22: memref<8x128xf32, #tpu.memory_space<vmem>>) attributes {dimension_semantics = [], scalar_prefetch = 0 : i64, scratch_operands = 0 : i64, tpu.core_type = #tpu.core_type<tc>} {
    %c0 = arith.constant 0 : index
    %c0_0 = arith.constant 0 : index
    %0 = vector.load %arg0[%c0, %c0_0] : memref<8x128xf32, #tpu.memory_space<vmem>>, vector<8x128xf32>
    %c0_1 = arith.constant 0 : index
    %c0_2 = arith.constant 0 : index
    %1 = vector.load %arg1[%c0_1, %c0_2] : memref<128x128xf32, #tpu.memory_space<vmem>>, vector<128x128xf32>
    %c0_3 = arith.constant 0 : index
    %c0_4 = arith.constant 0 : index
    %2 = vector.load %arg2[%c0_3, %c0_4] : memref<1x128xf32, #tpu.memory_space<vmem>>, vector<1x128xf32>
    %cst = arith.constant dense<0.000000e+00> : vector<8x128xf32>
    %3 = tpu.matmul %0, %1, %cst {dimension_numbers = #tpu.dot_dimension_numbers<[1], [0], [0], [1], [0, 0, 1, 1], [], []>} : vector<8x128xf32>, vector<128x128xf32>, vector<8x128xf32> -> vector<8x128xf32>
    %4 = vector.broadcast %2 : vector<1x128xf32> to vector<8x128xf32>
    %5 = arith.addf %3, %4 : vector<8x128xf32>
    %cst_5 = arith.constant 0.000000e+00 : f32
    %6 = vector.broadcast %cst_5 : f32 to vector<8x128xf32>
    %7 = arith.maximumf %5, %6 : vector<8x128xf32>
    %c0_6 = arith.constant 0 : index
    %c0_7 = arith.constant 0 : index
    %8 = vector.load %arg3[%c0_6, %c0_7] : memref<128x128xf32, #tpu.memory_space<vmem>>, vector<128x128xf32>
    %c0_8 = arith.constant 0 : index
    %c0_9 = arith.constant 0 : index
    %9 = vector.load %arg4[%c0_8, %c0_9] : memref<1x128xf32, #tpu.memory_space<vmem>>, vector<1x128xf32>
    %cst_10 = arith.constant dense<0.000000e+00> : vector<8x128xf32>
    %10 = tpu.matmul %7, %8, %cst_10 {dimension_numbers = #tpu.dot_dimension_numbers<[1], [0], [0], [1], [0, 0, 1, 1], [], []>} : vector<8x128xf32>, vector<128x128xf32>, vector<8x128xf32> -> vector<8x128xf32>
    %11 = vector.broadcast %9 : vector<1x128xf32> to vector<8x128xf32>
    %12 = arith.addf %10, %11 : vector<8x128xf32>
    %cst_11 = arith.constant 0.000000e+00 : f32
    %13 = vector.broadcast %cst_11 : f32 to vector<8x128xf32>
    %14 = arith.maximumf %12, %13 : vector<8x128xf32>
    %c0_12 = arith.constant 0 : index
    %c0_13 = arith.constant 0 : index
    %15 = vector.load %arg5[%c0_12, %c0_13] : memref<128x128xf32, #tpu.memory_space<vmem>>, vector<128x128xf32>
    %c0_14 = arith.constant 0 : index
    %c0_15 = arith.constant 0 : index
    %16 = vector.load %arg6[%c0_14, %c0_15] : memref<1x128xf32, #tpu.memory_space<vmem>>, vector<1x128xf32>
    %cst_16 = arith.constant dense<0.000000e+00> : vector<8x128xf32>
    %17 = tpu.matmul %14, %15, %cst_16 {dimension_numbers = #tpu.dot_dimension_numbers<[1], [0], [0], [1], [0, 0, 1, 1], [], []>} : vector<8x128xf32>, vector<128x128xf32>, vector<8x128xf32> -> vector<8x128xf32>
    %18 = vector.broadcast %16 : vector<1x128xf32> to vector<8x128xf32>
    %19 = arith.addf %17, %18 : vector<8x128xf32>
    %cst_17 = arith.constant 0.000000e+00 : f32
    %20 = vector.broadcast %cst_17 : f32 to vector<8x128xf32>
    %21 = arith.maximumf %19, %20 : vector<8x128xf32>
    %c0_18 = arith.constant 0 : index
    %c0_19 = arith.constant 0 : index
    %22 = vector.load %arg7[%c0_18, %c0_19] : memref<128x128xf32, #tpu.memory_space<vmem>>, vector<128x128xf32>
    %c0_20 = arith.constant 0 : index
    %c0_21 = arith.constant 0 : index
    %23 = vector.load %arg8[%c0_20, %c0_21] : memref<1x128xf32, #tpu.memory_space<vmem>>, vector<1x128xf32>
    %cst_22 = arith.constant dense<0.000000e+00> : vector<8x128xf32>
    %24 = tpu.matmul %21, %22, %cst_22 {dimension_numbers = #tpu.dot_dimension_numbers<[1], [0], [0], [1], [0, 0, 1, 1], [], []>} : vector<8x128xf32>, vector<128x128xf32>, vector<8x128xf32> -> vector<8x128xf32>
    %25 = vector.broadcast %23 : vector<1x128xf32> to vector<8x128xf32>
    %26 = arith.addf %24, %25 : vector<8x128xf32>
    %cst_23 = arith.constant 0.000000e+00 : f32
    %27 = vector.broadcast %cst_23 : f32 to vector<8x128xf32>
    %28 = arith.maximumf %26, %27 : vector<8x128xf32>
    %c0_24 = arith.constant 0 : index
    %c0_25 = arith.constant 0 : index
    %29 = vector.load %arg9[%c0_24, %c0_25] : memref<128x128xf32, #tpu.memory_space<vmem>>, vector<128x128xf32>
    %c0_26 = arith.constant 0 : index
    %c0_27 = arith.constant 0 : index
    %30 = vector.load %arg10[%c0_26, %c0_27] : memref<1x128xf32, #tpu.memory_space<vmem>>, vector<1x128xf32>
    %cst_28 = arith.constant dense<0.000000e+00> : vector<8x128xf32>
    %31 = tpu.matmul %28, %29, %cst_28 {dimension_numbers = #tpu.dot_dimension_numbers<[1], [0], [0], [1], [0, 0, 1, 1], [], []>} : vector<8x128xf32>, vector<128x128xf32>, vector<8x128xf32> -> vector<8x128xf32>
    %32 = vector.broadcast %30 : vector<1x128xf32> to vector<8x128xf32>
    %33 = arith.addf %31, %32 : vector<8x128xf32>
    %c0_29 = arith.constant 0 : index
    %c0_30 = arith.constant 0 : index
    %34 = vector.load %arg21[%c0_29, %c0_30] : memref<8x128xf32, #tpu.memory_space<vmem>>, vector<8x128xf32>
    tpu.vector_store %arg21[%c0_29, %c0_30], %33 {strides = array<i32>} : memref<8x128xf32, #tpu.memory_space<vmem>>, vector<8x128xf32>,
    %c0_31 = arith.constant 0 : index
    %c0_32 = arith.constant 0 : index
    %35 = vector.load %arg11[%c0_31, %c0_32] : memref<128x128xf32, #tpu.memory_space<vmem>>, vector<128x128xf32>
    %c0_33 = arith.constant 0 : index
    %c0_34 = arith.constant 0 : index
    %36 = vector.load %arg12[%c0_33, %c0_34] : memref<1x128xf32, #tpu.memory_space<vmem>>, vector<1x128xf32>
    %cst_35 = arith.constant dense<0.000000e+00> : vector<8x128xf32>
    %37 = tpu.matmul %33, %35, %cst_35 {dimension_numbers = #tpu.dot_dimension_numbers<[1], [0], [0], [1], [0, 0, 1, 1], [], []>} : vector<8x128xf32>, vector<128x128xf32>, vector<8x128xf32> -> vector<8x128xf32>
    %38 = vector.broadcast %36 : vector<1x128xf32> to vector<8x128xf32>
    %39 = arith.addf %37, %38 : vector<8x128xf32>
    %cst_36 = arith.constant 0.000000e+00 : f32
    %40 = vector.broadcast %cst_36 : f32 to vector<8x128xf32>
    %41 = arith.maximumf %39, %40 : vector<8x128xf32>
    %c0_37 = arith.constant 0 : index
    %c0_38 = arith.constant 0 : index
    %42 = vector.load %arg13[%c0_37, %c0_38] : memref<128x128xf32, #tpu.memory_space<vmem>>, vector<128x128xf32>
    %c0_39 = arith.constant 0 : index
    %c0_40 = arith.constant 0 : index
    %43 = vector.load %arg14[%c0_39, %c0_40] : memref<1x128xf32, #tpu.memory_space<vmem>>, vector<1x128xf32>
    %cst_41 = arith.constant dense<0.000000e+00> : vector<8x128xf32>
    %44 = tpu.matmul %41, %42, %cst_41 {dimension_numbers = #tpu.dot_dimension_numbers<[1], [0], [0], [1], [0, 0, 1, 1], [], []>} : vector<8x128xf32>, vector<128x128xf32>, vector<8x128xf32> -> vector<8x128xf32>
    %45 = vector.broadcast %43 : vector<1x128xf32> to vector<8x128xf32>
    %46 = arith.addf %44, %45 : vector<8x128xf32>
    %cst_42 = arith.constant 0.000000e+00 : f32
    %47 = vector.broadcast %cst_42 : f32 to vector<8x128xf32>
    %48 = arith.maximumf %46, %47 : vector<8x128xf32>
    %c0_43 = arith.constant 0 : index
    %c0_44 = arith.constant 0 : index
    %49 = vector.load %arg15[%c0_43, %c0_44] : memref<128x128xf32, #tpu.memory_space<vmem>>, vector<128x128xf32>
    %c0_45 = arith.constant 0 : index
    %c0_46 = arith.constant 0 : index
    %50 = vector.load %arg16[%c0_45, %c0_46] : memref<1x128xf32, #tpu.memory_space<vmem>>, vector<1x128xf32>
    %cst_47 = arith.constant dense<0.000000e+00> : vector<8x128xf32>
    %51 = tpu.matmul %48, %49, %cst_47 {dimension_numbers = #tpu.dot_dimension_numbers<[1], [0], [0], [1], [0, 0, 1, 1], [], []>} : vector<8x128xf32>, vector<128x128xf32>, vector<8x128xf32> -> vector<8x128xf32>
    %52 = vector.broadcast %50 : vector<1x128xf32> to vector<8x128xf32>
    %53 = arith.addf %51, %52 : vector<8x128xf32>
    %cst_48 = arith.constant 0.000000e+00 : f32
    %54 = vector.broadcast %cst_48 : f32 to vector<8x128xf32>
    %55 = arith.maximumf %53, %54 : vector<8x128xf32>
    %c0_49 = arith.constant 0 : index
    %c0_50 = arith.constant 0 : index
    %56 = vector.load %arg17[%c0_49, %c0_50] : memref<128x128xf32, #tpu.memory_space<vmem>>, vector<128x128xf32>
    %c0_51 = arith.constant 0 : index
    %c0_52 = arith.constant 0 : index
    %57 = vector.load %arg18[%c0_51, %c0_52] : memref<1x128xf32, #tpu.memory_space<vmem>>, vector<1x128xf32>
    %cst_53 = arith.constant dense<0.000000e+00> : vector<8x128xf32>
    %58 = tpu.matmul %55, %56, %cst_53 {dimension_numbers = #tpu.dot_dimension_numbers<[1], [0], [0], [1], [0, 0, 1, 1], [], []>} : vector<8x128xf32>, vector<128x128xf32>, vector<8x128xf32> -> vector<8x128xf32>
    %59 = vector.broadcast %57 : vector<1x128xf32> to vector<8x128xf32>
    %60 = arith.addf %58, %59 : vector<8x128xf32>
    %cst_54 = arith.constant 0.000000e+00 : f32
    %61 = vector.broadcast %cst_54 : f32 to vector<8x128xf32>
    %62 = arith.maximumf %60, %61 : vector<8x128xf32>
    %c0_55 = arith.constant 0 : index
    %c0_56 = arith.constant 0 : index
    %63 = vector.load %arg19[%c0_55, %c0_56] : memref<128x128xf32, #tpu.memory_space<vmem>>, vector<128x128xf32>
    %c0_57 = arith.constant 0 : index
    %c0_58 = arith.constant 0 : index
    %64 = vector.load %arg20[%c0_57, %c0_58] : memref<1x128xf32, #tpu.memory_space<vmem>>, vector<1x128xf32>
    %cst_59 = arith.constant dense<0.000000e+00> : vector<8x128xf32>
    %65 = tpu.matmul %62, %63, %cst_59 {dimension_numbers = #tpu.dot_dimension_numbers<[1], [0], [0], [1], [0, 0, 1, 1], [], []>} : vector<8x128xf32>, vector<128x128xf32>, vector<8x128xf32> -> vector<8x128xf32>
    %66 = vector.broadcast %64 : vector<1x128xf32> to vector<8x128xf32>
    %67 = arith.addf %65, %66 : vector<8x128xf32>
    %c0_60 = arith.constant 0 : index
    %c0_61 = arith.constant 0 : index
    %68 = vector.load %arg22[%c0_60, %c0_61] : memref<8x128xf32, #tpu.memory_space<vmem>>, vector<8x128xf32>
    tpu.vector_store %arg22[%c0_60, %c0_61], %67 {strides = array<i32>} : memref<8x128xf32, #tpu.memory_space<vmem>>, vector<8x128xf32>,
    return
  }
}

</mosaic_0001>

<llo_original>
// kernel: autoencoder_forward.1
$region0: #{autoencoder_forward.1}
  #allocation0 [shape = 'u32[]', space=smem, size = 0x4, offset = 0x4, fixed_abs, tag = 'smem constant byte address 0x4 - core index']
  #allocation1 [shape = 'u32[144,128]{1,0:T(1,128)}', space=vmem, size = 0x12000, scoped, tag = 'internal scratch']
  %s0 = inlined_call_operand.vmem [shape: f32[8,128], index: 0, kind: input, shape index: {}]
  %s1 = inlined_call_operand.hbm [shape: f32[128,128], index: 1, kind: input, shape index: {}]
  %s2 = inlined_call_operand.vmem [shape: f32[1,128], index: 2, kind: input, shape index: {}]
  %s3 = inlined_call_operand.hbm [shape: f32[128,128], index: 3, kind: input, shape index: {}]
  %s4 = inlined_call_operand.vmem [shape: f32[1,128], index: 4, kind: input, shape index: {}]
  %s5 = inlined_call_operand.hbm [shape: f32[128,128], index: 5, kind: input, shape index: {}]
  %s6 = inlined_call_operand.vmem [shape: f32[1,128], index: 6, kind: input, shape index: {}]
  %s7 = inlined_call_operand.hbm [shape: f32[128,128], index: 7, kind: input, shape index: {}]
  %s8 = inlined_call_operand.vmem [shape: f32[1,128], index: 8, kind: input, shape index: {}]
  %s9 = inlined_call_operand.hbm [shape: f32[128,128], index: 9, kind: input, shape index: {}]
  %s10 = inlined_call_operand.vmem [shape: f32[1,128], index: 10, kind: input, shape index: {}]
  %s11 = inlined_call_operand.hbm [shape: f32[128,128], index: 11, kind: input, shape index: {}]
  %s12 = inlined_call_operand.vmem [shape: f32[1,128], index: 12, kind: input, shape index: {}]
  %s13 = inlined_call_operand.hbm [shape: f32[128,128], index: 13, kind: input, shape index: {}]
  %s14 = inlined_call_operand.vmem [shape: f32[1,128], index: 14, kind: input, shape index: {}]
  %s15 = inlined_call_operand.hbm [shape: f32[128,128], index: 15, kind: input, shape index: {}]
  %s16 = inlined_call_operand.vmem [shape: f32[1,128], index: 16, kind: input, shape index: {}]
  %s17 = inlined_call_operand.hbm [shape: f32[128,128], index: 17, kind: input, shape index: {}]
  %s18 = inlined_call_operand.vmem [shape: f32[1,128], index: 18, kind: input, shape index: {}]
  %s19 = inlined_call_operand.hbm [shape: f32[128,128], index: 19, kind: input, shape index: {}]
  %s20 = inlined_call_operand.vmem [shape: f32[1,128], index: 20, kind: input, shape index: {}]
  %s21 = inlined_call_operand.vmem [shape: f32[8,128], index: 21, kind: output, shape index: {0}]
  %s22 = inlined_call_operand.hbm [shape: f32[8,128], index: 22, kind: output, shape index: {1}]
  %23 = xla_tuple %s21, %s22
  %s24 = sld [smem:[#allocation0]]
  $region142: #{autoencoder_forward.1} parent=0
    _
  %s26 = ssub.s32 1, %s24
  %s27 = scalar_select 0, %s26, %s24
  $region1: #{autoencoder_forward.1} parent=0
    #allocation2 [shape = 'u8[65536]{0}', space=vmem, size = 0x10000, scoped, tag = 'input window, operand 1, single buffered']
    #allocation3 [shape = 's32[1]{0}', space=sflag, size = 0x4, scoped, tag = 'scoped memory for autoencoder_forward.1']
    #allocation4 [shape = 's32[1]{0}', space=sflag, size = 0x4, scoped, tag = 'scoped memory for autoencoder_forward.1']
    #allocation5 [shape = 'u8[65536]{0}', space=vmem, size = 0x10000, scoped, tag = 'input window, operand 3, single buffered']
    #allocation6 [shape = 's32[1]{0}', space=sflag, size = 0x4, scoped, tag = 'scoped memory for autoencoder_forward.1']
    #allocation7 [shape = 'u8[65536]{0}', space=vmem, size = 0x10000, scoped, tag = 'input window, operand 5, single buffered']
    #allocation8 [shape = 'u8[65536]{0}', space=vmem, size = 0x10000, scoped, tag = 'input window, operand 7, single buffered']
    #allocation9 [shape = 's32[1]{0}', space=sflag, size = 0x4, scoped, tag = 'scoped memory for autoencoder_forward.1']
    #allocation10 [shape = 'u8[65536]{0}', space=vmem, size = 0x10000, scoped, tag = 'input window, operand 9, single buffered']
    #allocation11 [shape = 'u8[65536]{0}', space=vmem, size = 0x10000, scoped, tag = 'input window, operand 11, single buffered']
    #allocation12 [shape = 's32[1]{0}', space=sflag, size = 0x4, scoped, tag = 'scoped memory for autoencoder_forward.1']
    #allocation13 [shape = 'u8[65536]{0}', space=vmem, size = 0x10000, scoped, tag = 'input window, operand 13, single buffered']
    #allocation14 [shape = 'u8[65536]{0}', space=vmem, size = 0x10000, scoped, tag = 'input window, operand 15, single buffered']
    #allocation15 [shape = 's32[1]{0}', space=sflag, size = 0x4, scoped, tag = 'scoped memory for autoencoder_forward.1']
    #allocation16 [shape = 'u8[65536]{0}', space=vmem, size = 0x10000, scoped, tag = 'input window, operand 17, single buffered']
    #allocation17 [shape = 'u8[65536]{0}', space=vmem, size = 0x10000, scoped, tag = 'input window, operand 19, single buffered']
    #allocation18 [shape = 's32[1]{0}', space=sflag, size = 0x4, scoped, tag = 'scoped memory for autoencoder_forward.1']
    #allocation19 [shape = 'u8[4096]{0}', space=vmem, size = 0x1000, scoped, tag = 'output window, operand 1, single buffered']
    %28 = vsyncpa [#allocation3], 0
    %29 = vsyncpa [#allocation6], 0
    %30 = vsyncpa [#allocation9], 0
    %31 = vsyncpa [#allocation12], 0
    %32 = vsyncpa [#allocation15], 0
    %33 = vsyncpa [#allocation18], 0
    %34 = vsyncpa [#allocation4], 0
    // Predicated region
    $region2: #{autoencoder_forward.1} parent=1 // pred_check
      _
    $region3: #{autoencoder_forward.1} parent=1 // pred_check_branch
      %36 = sbr.rel (0) target = $region5
    $region4: #{autoencoder_forward.1} parent=1 // pred_region
      _
    $region5: #{autoencoder_forward.1} parent=1 // pred_fallthru
      _
    // Predicated region
    $region6: #{autoencoder_forward.1} parent=1 // pred_check
      _
    $region7: #{autoencoder_forward.1} parent=1 // pred_check_branch
      %38 = sbr.rel (0) target = $region9
    $region8: #{autoencoder_forward.1} parent=1 // pred_region
      %s40 = ssub.s32 2048, 2048
      %41 = vsyncadd [#allocation3], %s40
      %s42 = sshll.u32 [#allocation2], 4
      %s43 = int_to_ptr.vmem [resolvable:$true] %s42
      %48 = dma.hbm_to_vmem [thread:$0]  %s1, 2048, %s43, [#allocation3], 128, 128, 8
    $region9: #{autoencoder_forward.1} parent=1 // pred_fallthru
      _
    // Predicated region
    $region10: #{autoencoder_forward.1} parent=1 // pred_check
      _
    $region11: #{autoencoder_forward.1} parent=1 // pred_check_branch
      %50 = sbr.rel (0) target = $region13
    $region12: #{autoencoder_forward.1} parent=1 // pred_region
      _
    $region13: #{autoencoder_forward.1} parent=1 // pred_fallthru
      _
    // Predicated region
    $region14: #{autoencoder_forward.1} parent=1 // pred_check
      _
    $region15: #{autoencoder_forward.1} parent=1 // pred_check_branch
      %52 = sbr.rel (0) target = $region17
    $region16: #{autoencoder_forward.1} parent=1 // pred_region
      %s54 = ssub.s32 2048, 2048
      %55 = vsyncadd [#allocation6], %s54
      %s56 = sshll.u32 [#allocation5], 4
      %s57 = int_to_ptr.vmem [resolvable:$true] %s56
      %62 = dma.hbm_to_vmem [thread:$0]  %s3, 2048, %s57, [#allocation6], 128, 128, 8
    $region17: #{autoencoder_forward.1} parent=1 // pred_fallthru
      _
    // Predicated region
    $region18: #{autoencoder_forward.1} parent=1 // pred_check
      _
    $region19: #{autoencoder_forward.1} parent=1 // pred_check_branch
      %64 = sbr.rel (0) target = $region21
    $region20: #{autoencoder_forward.1} parent=1 // pred_region
      _
    $region21: #{autoencoder_forward.1} parent=1 // pred_fallthru
      _
    // Predicated region
    $region22: #{autoencoder_forward.1} parent=1 // pred_check
      _
    $region23: #{autoencoder_forward.1} parent=1 // pred_check_branch
      %66 = sbr.rel (0) target = $region25
    $region24: #{autoencoder_forward.1} parent=1 // pred_region
      %s68 = ssub.s32 2048, 2048
      %69 = vsyncadd [#allocation6], %s68
      %s70 = sshll.u32 [#allocation7], 4
      %s71 = int_to_ptr.vmem [resolvable:$true] %s70
      %76 = dma.hbm_to_vmem [thread:$0]  %s5, 2048, %s71, [#allocation6], 128, 128, 8
    $region25: #{autoencoder_forward.1} parent=1 // pred_fallthru
      _
    // Predicated region
    $region26: #{autoencoder_forward.1} parent=1 // pred_check
      _
    $region27: #{autoencoder_forward.1} parent=1 // pred_check_branch
      %78 = sbr.rel (0) target = $region29
    $region28: #{autoencoder_forward.1} parent=1 // pred_region
      _
    $region29: #{autoencoder_forward.1} parent=1 // pred_fallthru
      _
    // Predicated region
    $region30: #{autoencoder_forward.1} parent=1 // pred_check
      _
    $region31: #{autoencoder_forward.1} parent=1 // pred_check_branch
      %80 = sbr.rel (0) target = $region33
    $region32: #{autoencoder_forward.1} parent=1 // pred_region
      %s82 = ssub.s32 2048, 2048
      %83 = vsyncadd [#allocation9], %s82
      %s84 = sshll.u32 [#allocation8], 4
      %s85 = int_to_ptr.vmem [resolvable:$true] %s84
      %90 = dma.hbm_to_vmem [thread:$0]  %s7, 2048, %s85, [#allocation9], 128, 128, 8
    $region33: #{autoencoder_forward.1} parent=1 // pred_fallthru
      _
    // Predicated region
    $region34: #{autoencoder_forward.1} parent=1 // pred_check
      _
    $region35: #{autoencoder_forward.1} parent=1 // pred_check_branch
      %92 = sbr.rel (0) target = $region37
    $region36: #{autoencoder_forward.1} parent=1 // pred_region
      _
    $region37: #{autoencoder_forward.1} parent=1 // pred_fallthru
      _
    // Predicated region
    $region38: #{autoencoder_forward.1} parent=1 // pred_check
      _
    $region39: #{autoencoder_forward.1} parent=1 // pred_check_branch
      %94 = sbr.rel (0) target = $region41
    $region40: #{autoencoder_forward.1} parent=1 // pred_region
      %s96 = ssub.s32 2048, 2048
      %97 = vsyncadd [#allocation9], %s96
      %s98 = sshll.u32 [#allocation10], 4
      %s99 = int_to_ptr.vmem [resolvable:$true] %s98
      %104 = dma.hbm_to_vmem [thread:$0]  %s9, 2048, %s99, [#allocation9], 128, 128, 8
    $region41: #{autoencoder_forward.1} parent=1 // pred_fallthru
      _
    // Predicated region
    $region42: #{autoencoder_forward.1} parent=1 // pred_check
      _
    $region43: #{autoencoder_forward.1} parent=1 // pred_check_branch
      %106 = sbr.rel (0) target = $region45
    $region44: #{autoencoder_forward.1} parent=1 // pred_region
      _
    $region45: #{autoencoder_forward.1} parent=1 // pred_fallthru
      _
    // Predicated region
    $region46: #{autoencoder_forward.1} parent=1 // pred_check
      _
    $region47: #{autoencoder_forward.1} parent=1 // pred_check_branch
      %108 = sbr.rel (0) target = $region49
    $region48: #{autoencoder_forward.1} parent=1 // pred_region
      %s110 = ssub.s32 2048, 2048
      %111 = vsyncadd [#allocation12], %s110
      %s112 = sshll.u32 [#allocation11], 4
      %s113 = int_to_ptr.vmem [resolvable:$true] %s112
      %118 = dma.hbm_to_vmem [thread:$0]  %s11, 2048, %s113, [#allocation12], 128, 128, 8
    $region49: #{autoencoder_forward.1} parent=1 // pred_fallthru
      _
    // Predicated region
    $region50: #{autoencoder_forward.1} parent=1 // pred_check
      _
    $region51: #{autoencoder_forward.1} parent=1 // pred_check_branch
      %120 = sbr.rel (0) target = $region53
    $region52: #{autoencoder_forward.1} parent=1 // pred_region
      _
    $region53: #{autoencoder_forward.1} parent=1 // pred_fallthru
      _
    // Predicated region
    $region54: #{autoencoder_forward.1} parent=1 // pred_check
      _
    $region55: #{autoencoder_forward.1} parent=1 // pred_check_branch
      %122 = sbr.rel (0) target = $region57
    $region56: #{autoencoder_forward.1} parent=1 // pred_region
      %s124 = ssub.s32 2048, 2048
      %125 = vsyncadd [#allocation12], %s124
      %s126 = sshll.u32 [#allocation13], 4
      %s127 = int_to_ptr.vmem [resolvable:$true] %s126
      %132 = dma.hbm_to_vmem [thread:$0]  %s13, 2048, %s127, [#allocation12], 128, 128, 8
    $region57: #{autoencoder_forward.1} parent=1 // pred_fallthru
      _
    // Predicated region
    $region58: #{autoencoder_forward.1} parent=1 // pred_check
      _
    $region59: #{autoencoder_forward.1} parent=1 // pred_check_branch
      %134 = sbr.rel (0) target = $region61
    $region60: #{autoencoder_forward.1} parent=1 // pred_region
      _
    $region61: #{autoencoder_forward.1} parent=1 // pred_fallthru
      _
    // Predicated region
    $region62: #{autoencoder_forward.1} parent=1 // pred_check
      _
    $region63: #{autoencoder_forward.1} parent=1 // pred_check_branch
      %136 = sbr.rel (0) target = $region65
    $region64: #{autoencoder_forward.1} parent=1 // pred_region
      %s138 = ssub.s32 2048, 2048
      %139 = vsyncadd [#allocation15], %s138
      %s140 = sshll.u32 [#allocation14], 4
      %s141 = int_to_ptr.vmem [resolvable:$true] %s140
      %146 = dma.hbm_to_vmem [thread:$0]  %s15, 2048, %s141, [#allocation15], 128, 128, 8
    $region65: #{autoencoder_forward.1} parent=1 // pred_fallthru
      _
    // Predicated region
    $region66: #{autoencoder_forward.1} parent=1 // pred_check
      _
    $region67: #{autoencoder_forward.1} parent=1 // pred_check_branch
      %148 = sbr.rel (0) target = $region69
    $region68: #{autoencoder_forward.1} parent=1 // pred_region
      _
    $region69: #{autoencoder_forward.1} parent=1 // pred_fallthru
      _
    // Predicated region
    $region70: #{autoencoder_forward.1} parent=1 // pred_check
      _
    $region71: #{autoencoder_forward.1} parent=1 // pred_check_branch
      %150 = sbr.rel (0) target = $region73
    $region72: #{autoencoder_forward.1} parent=1 // pred_region
      %s152 = ssub.s32 2048, 2048
      %153 = vsyncadd [#allocation15], %s152
      %s154 = sshll.u32 [#allocation16], 4
      %s155 = int_to_ptr.vmem [resolvable:$true] %s154
      %160 = dma.hbm_to_vmem [thread:$0]  %s17, 2048, %s155, [#allocation15], 128, 128, 8
    $region73: #{autoencoder_forward.1} parent=1 // pred_fallthru
      _
    // Predicated region
    $region74: #{autoencoder_forward.1} parent=1 // pred_check
      _
    $region75: #{autoencoder_forward.1} parent=1 // pred_check_branch
      %162 = sbr.rel (0) target = $region77
    $region76: #{autoencoder_forward.1} parent=1 // pred_region
      _
    $region77: #{autoencoder_forward.1} parent=1 // pred_fallthru
      _
    // Predicated region
    $region78: #{autoencoder_forward.1} parent=1 // pred_check
      _
    $region79: #{autoencoder_forward.1} parent=1 // pred_check_branch
      %164 = sbr.rel (0) target = $region81
    $region80: #{autoencoder_forward.1} parent=1 // pred_region
      %s166 = ssub.s32 2048, 2048
      %167 = vsyncadd [#allocation18], %s166
      %s168 = sshll.u32 [#allocation17], 4
      %s169 = int_to_ptr.vmem [resolvable:$true] %s168
      %174 = dma.hbm_to_vmem [thread:$0]  %s19, 2048, %s169, [#allocation18], 128, 128, 8
    $region81: #{autoencoder_forward.1} parent=1 // pred_fallthru
      _
    // Predicated region
    $region82: #{autoencoder_forward.1} parent=1 // pred_check
      _
    $region83: #{autoencoder_forward.1} parent=1 // pred_check_branch
      %176 = sbr.rel (0) target = $region85
    $region84: #{autoencoder_forward.1} parent=1 // pred_region
      _
    $region85: #{autoencoder_forward.1} parent=1 // pred_fallthru
      _
    // Predicated region
    $region86: #{autoencoder_forward.1} parent=1 // pred_check
      _
    $region87: #{autoencoder_forward.1} parent=1 // pred_check_branch
      %178 = sbr.rel (0) target = $region89
    $region88: #{autoencoder_forward.1} parent=1 // pred_region
      %179 = dma.done [#allocation3], 2048
    $region89: #{autoencoder_forward.1} parent=1 // pred_fallthru
      _
    // Predicated region
    $region90: #{autoencoder_forward.1} parent=1 // pred_check
      _
    $region91: #{autoencoder_forward.1} parent=1 // pred_check_branch
      %181 = sbr.rel (0) target = $region93
    $region92: #{autoencoder_forward.1} parent=1 // pred_region
      %182 = dma.done [#allocation6], 2048
    $region93: #{autoencoder_forward.1} parent=1 // pred_fallthru
      _
    // Predicated region
    $region94: #{autoencoder_forward.1} parent=1 // pred_check
      _
    $region95: #{autoencoder_forward.1} parent=1 // pred_check_branch
      %184 = sbr.rel (0) target = $region97
    $region96: #{autoencoder_forward.1} parent=1 // pred_region
      %185 = dma.done [#allocation6], 2048
    $region97: #{autoencoder_forward.1} parent=1 // pred_fallthru
      _
    // Predicated region
    $region98: #{autoencoder_forward.1} parent=1 // pred_check
      _
    $region99: #{autoencoder_forward.1} parent=1 // pred_check_branch
      %187 = sbr.rel (0) target = $region101
    $region100: #{autoencoder_forward.1} parent=1 // pred_region
      %188 = dma.done [#allocation9], 2048
    $region101: #{autoencoder_forward.1} parent=1 // pred_fallthru
      _
    // Predicated region
    $region102: #{autoencoder_forward.1} parent=1 // pred_check
      _
    $region103: #{autoencoder_forward.1} parent=1 // pred_check_branch
      %190 = sbr.rel (0) target = $region105
    $region104: #{autoencoder_forward.1} parent=1 // pred_region
      %191 = dma.done [#allocation9], 2048
    $region105: #{autoencoder_forward.1} parent=1 // pred_fallthru
      _
    // Predicated region
    $region106: #{autoencoder_forward.1} parent=1 // pred_check
      _
    $region107: #{autoencoder_forward.1} parent=1 // pred_check_branch
      %193 = sbr.rel (0) target = $region109
    $region108: #{autoencoder_forward.1} parent=1 // pred_region
      %194 = dma.done [#allocation12], 2048
    $region109: #{autoencoder_forward.1} parent=1 // pred_fallthru
      _
    // Predicated region
    $region110: #{autoencoder_forward.1} parent=1 // pred_check
      _
    $region111: #{autoencoder_forward.1} parent=1 // pred_check_branch
      %196 = sbr.rel (0) target = $region113
    $region112: #{autoencoder_forward.1} parent=1 // pred_region
      %197 = dma.done [#allocation12], 2048
    $region113: #{autoencoder_forward.1} parent=1 // pred_fallthru
      _
    // Predicated region
    $region114: #{autoencoder_forward.1} parent=1 // pred_check
      _
    $region115: #{autoencoder_forward.1} parent=1 // pred_check_branch
      %199 = sbr.rel (0) target = $region117
    $region116: #{autoencoder_forward.1} parent=1 // pred_region
      %200 = dma.done [#allocation15], 2048
    $region117: #{autoencoder_forward.1} parent=1 // pred_fallthru
      _
    // Predicated region
    $region118: #{autoencoder_forward.1} parent=1 // pred_check
      _
    $region119: #{autoencoder_forward.1} parent=1 // pred_check_branch
      %202 = sbr.rel (0) target = $region121
    $region120: #{autoencoder_forward.1} parent=1 // pred_region
      %203 = dma.done [#allocation15], 2048
    $region121: #{autoencoder_forward.1} parent=1 // pred_fallthru
      _
    // Predicated region
    $region122: #{autoencoder_forward.1} parent=1 // pred_check
      _
    $region123: #{autoencoder_forward.1} parent=1 // pred_check_branch
      %205 = sbr.rel (0) target = $region125
    $region124: #{autoencoder_forward.1} parent=1 // pred_region
      %206 = dma.done [#allocation18], 2048
    $region125: #{autoencoder_forward.1} parent=1 // pred_fallthru
      _
    %v207 = vld [vmem:[%s0] sm:$0xff]
    %v208 = vld [vmem:[#allocation2] sm:$0xff]
    %v209 = vld [vmem:[#allocation2 + $0x8] sm:$0xff]
    %v210 = vld [vmem:[#allocation2 + $0x10] sm:$0xff]
    %v211 = vld [vmem:[#allocation2 + $0x18] sm:$0xff]
    %v212 = vld [vmem:[#allocation2 + $0x20] sm:$0xff]
    %v213 = vld [vmem:[#allocation2 + $0x28] sm:$0xff]
    %v214 = vld [vmem:[#allocation2 + $0x30] sm:$0xff]
    %v215 = vld [vmem:[#allocation2 + $0x38] sm:$0xff]
    %v216 = vld [vmem:[#allocation2 + $0x40] sm:$0xff]
    %v217 = vld [vmem:[#allocation2 + $0x48] sm:$0xff]
    %v218 = vld [vmem:[#allocation2 + $0x50] sm:$0xff]
    %v219 = vld [vmem:[#allocation2 + $0x58] sm:$0xff]
    %v220 = vld [vmem:[#allocation2 + $0x60] sm:$0xff]
    %v221 = vld [vmem:[#allocation2 + $0x68] sm:$0xff]
    %v222 = vld [vmem:[#allocation2 + $0x70] sm:$0xff]
    %v223 = vld [vmem:[#allocation2 + $0x78] sm:$0xff]
    %v224 = vld [vmem:[%s2] sm:$0x1]
    %v226 = vlaneseq
    %v227 = vshrl.u32 %v226, 7
    %v228 = vsub.s32 0, %v227
    %v229 = vrot.slane %v224, %v228
    %231 = vmatprep.subr.mxu0 0.0
    %232 = vmatpush1.msra.mxu0 %v208
    %233 = vmatprep.subr.mxu0 0.0
    %234 = vmatpush1.msra.mxu0 %v209
    %235 = vmatprep.subr.mxu0 0.0
    %236 = vmatpush1.msra.mxu0 %v210
    %237 = vmatprep.subr.mxu0 0.0
    %238 = vmatpush1.msra.mxu0 %v211
    %239 = vmatprep.subr.mxu0 0.0
    %240 = vmatpush1.msra.mxu0 %v212
    %241 = vmatprep.subr.mxu0 0.0
    %242 = vmatpush1.msra.mxu0 %v213
    %243 = vmatprep.subr.mxu0 0.0
    %244 = vmatpush1.msra.mxu0 %v214
    %245 = vmatprep.subr.mxu0 0.0
    %246 = vmatpush1.msra.mxu0 %v215
    %247 = vmatprep.subr.mxu0 0.0
    %248 = vmatpush1.msra.mxu0 %v216
    %249 = vmatprep.subr.mxu0 0.0
    %250 = vmatpush1.msra.mxu0 %v217
    %251 = vmatprep.subr.mxu0 0.0
    %252 = vmatpush1.msra.mxu0 %v218
    %253 = vmatprep.subr.mxu0 0.0
    %254 = vmatpush1.msra.mxu0 %v219
    %255 = vmatprep.subr.mxu0 0.0
    %256 = vmatpush1.msra.mxu0 %v220
    %257 = vmatprep.subr.mxu0 0.0
    %258 = vmatpush1.msra.mxu0 %v221
    %259 = vmatprep.subr.mxu0 0.0
    %260 = vmatpush1.msra.mxu0 %v222
    %261 = vmatprep.subr.mxu0 0.0
    %262 = vmatpush1.msra.mxu0 %v223
    %263 = vmatprep.subr.mxu0 0.0
    %264 = vmatpush1.msra.mxu0 0.0
    %265 = vmatprep.subr.mxu0 0.0
    %266 = vmatpush1.msra.mxu0 0.0
    %267 = vmatprep.subr.mxu0 0.0
    %268 = vmatpush1.msra.mxu0 0.0
    %269 = vmatprep.subr.mxu0 0.0
    %270 = vmatpush1.msra.mxu0 0.0
    %271 = vmatprep.subr.mxu0 0.0
    %272 = vmatpush1.msra.mxu0 0.0
    %273 = vmatprep.subr.mxu0 0.0
    %274 = vmatpush1.msra.mxu0 0.0
    %275 = vmatprep.subr.mxu0 0.0
    %276 = vmatpush1.msra.mxu0 0.0
    %277 = vmatprep.subr.mxu0 0.0
    %278 = vmatpush1.msra.mxu0 0.0
    %279 = vmatprep.subr.mxu0 0.0
    %280 = vmatpush1.msra.mxu0 0.0
    %281 = vmatprep.subr.mxu0 0.0
    %282 = vmatpush1.msra.mxu0 0.0
    %283 = vmatprep.subr.mxu0 0.0
    %284 = vmatpush1.msra.mxu0 0.0
    %285 = vmatprep.subr.mxu0 0.0
    %286 = vmatpush1.msra.mxu0 0.0
    %287 = vmatprep.subr.mxu0 0.0
    %288 = vmatpush1.msra.mxu0 0.0
    %289 = vmatprep.subr.mxu0 0.0
    %290 = vmatpush1.msra.mxu0 0.0
    %291 = vmatprep.subr.mxu0 0.0
    %292 = vmatpush1.msra.mxu0 0.0
    %293 = vmatprep.subr.mxu0 0.0
    %294 = vmatpush1.msra.mxu0 0.0
    %295 = vmatprep.mubr.f32.mxu0 0.0
    %296 = vmatmul.mubr.f32.gmra.mrb[0].mxu0 %v207
    %v297 = vpop.f32.mrb[0].mxu0
    %v298 = vadd.f32 %v229, %v297
    %v299 = vpop.f32.mrb[0].mxu0
    %300 = vdwg.mxu0
    %v301 = vmax.f32 %v298, 0.0
    %v302 = vld [vmem:[#allocation5] sm:$0xff]
    %v303 = vld [vmem:[#allocation5 + $0x8] sm:$0xff]
    %v304 = vld [vmem:[#allocation5 + $0x10] sm:$0xff]
    %v305 = vld [vmem:[#allocation5 + $0x18] sm:$0xff]
    %v306 = vld [vmem:[#allocation5 + $0x20] sm:$0xff]
    %v307 = vld [vmem:[#allocation5 + $0x28] sm:$0xff]
    %v308 = vld [vmem:[#allocation5 + $0x30] sm:$0xff]
    %v309 = vld [vmem:[#allocation5 + $0x38] sm:$0xff]
    %v310 = vld [vmem:[#allocation5 + $0x40] sm:$0xff]
    %v311 = vld [vmem:[#allocation5 + $0x48] sm:$0xff]
    %v312 = vld [vmem:[#allocation5 + $0x50] sm:$0xff]
    %v313 = vld [vmem:[#allocation5 + $0x58] sm:$0xff]
    %v314 = vld [vmem:[#allocation5 + $0x60] sm:$0xff]
    %v315 = vld [vmem:[#allocation5 + $0x68] sm:$0xff]
    %v316 = vld [vmem:[#allocation5 + $0x70] sm:$0xff]
    %v317 = vld [vmem:[#allocation5 + $0x78] sm:$0xff]
    %v318 = vld [vmem:[%s4] sm:$0x1]
    %v320 = vlaneseq
    %v321 = vshrl.u32 %v320, 7
    %v322 = vsub.s32 0, %v321
    %v323 = vrot.slane %v318, %v322
    %325 = vmatprep.subr.mxu0 0.0
    %326 = vmatpush1.msra.mxu0 %v302
    %327 = vmatprep.subr.mxu0 0.0
    %328 = vmatpush1.msra.mxu0 %v303
    %329 = vmatprep.subr.mxu0 0.0
    %330 = vmatpush1.msra.mxu0 %v304
    %331 = vmatprep.subr.mxu0 0.0
    %332 = vmatpush1.msra.mxu0 %v305
    %333 = vmatprep.subr.mxu0 0.0
    %334 = vmatpush1.msra.mxu0 %v306
    %335 = vmatprep.subr.mxu0 0.0
    %336 = vmatpush1.msra.mxu0 %v307
    %337 = vmatprep.subr.mxu0 0.0
    %338 = vmatpush1.msra.mxu0 %v308
    %339 = vmatprep.subr.mxu0 0.0
    %340 = vmatpush1.msra.mxu0 %v309
    %341 = vmatprep.subr.mxu0 0.0
    %342 = vmatpush1.msra.mxu0 %v310
    %343 = vmatprep.subr.mxu0 0.0
    %344 = vmatpush1.msra.mxu0 %v311
    %345 = vmatprep.subr.mxu0 0.0
    %346 = vmatpush1.msra.mxu0 %v312
    %347 = vmatprep.subr.mxu0 0.0
    %348 = vmatpush1.msra.mxu0 %v313
    %349 = vmatprep.subr.mxu0 0.0
    %350 = vmatpush1.msra.mxu0 %v314
    %351 = vmatprep.subr.mxu0 0.0
    %352 = vmatpush1.msra.mxu0 %v315
    %353 = vmatprep.subr.mxu0 0.0
    %354 = vmatpush1.msra.mxu0 %v316
    %355 = vmatprep.subr.mxu0 0.0
    %356 = vmatpush1.msra.mxu0 %v317
    %357 = vmatprep.subr.mxu0 0.0
    %358 = vmatpush1.msra.mxu0 0.0
    %359 = vmatprep.subr.mxu0 0.0
    %360 = vmatpush1.msra.mxu0 0.0
    %361 = vmatprep.subr.mxu0 0.0
    %362 = vmatpush1.msra.mxu0 0.0
    %363 = vmatprep.subr.mxu0 0.0
    %364 = vmatpush1.msra.mxu0 0.0
    %365 = vmatprep.subr.mxu0 0.0
    %366 = vmatpush1.msra.mxu0 0.0
    %367 = vmatprep.subr.mxu0 0.0
    %368 = vmatpush1.msra.mxu0 0.0
    %369 = vmatprep.subr.mxu0 0.0
    %370 = vmatpush1.msra.mxu0 0.0
    %371 = vmatprep.subr.mxu0 0.0
    %372 = vmatpush1.msra.mxu0 0.0
    %373 = vmatprep.subr.mxu0 0.0
    %374 = vmatpush1.msra.mxu0 0.0
    %375 = vmatprep.subr.mxu0 0.0
    %376 = vmatpush1.msra.mxu0 0.0
    %377 = vmatprep.subr.mxu0 0.0
    %378 = vmatpush1.msra.mxu0 0.0
    %379 = vmatprep.subr.mxu0 0.0
    %380 = vmatpush1.msra.mxu0 0.0
    %381 = vmatprep.subr.mxu0 0.0
    %382 = vmatpush1.msra.mxu0 0.0
    %383 = vmatprep.subr.mxu0 0.0
    %384 = vmatpush1.msra.mxu0 0.0
    %385 = vmatprep.subr.mxu0 0.0
    %386 = vmatpush1.msra.mxu0 0.0
    %387 = vmatprep.subr.mxu0 0.0
    %388 = vmatpush1.msra.mxu0 0.0
    %389 = vmatprep.mubr.f32.mxu0 0.0
    %390 = vmatmul.mubr.f32.gmra.mrb[0].mxu0 %v301
    %v391 = vpop.f32.mrb[0].mxu0
    %v392 = vadd.f32 %v323, %v391
    %v393 = vpop.f32.mrb[0].mxu0
    %394 = vdwg.mxu0
    %v395 = vmax.f32 %v392, 0.0
    %v396 = vld [vmem:[#allocation7] sm:$0xff]
    %v397 = vld [vmem:[#allocation7 + $0x8] sm:$0xff]
    %v398 = vld [vmem:[#allocation7 + $0x10] sm:$0xff]
    %v399 = vld [vmem:[#allocation7 + $0x18] sm:$0xff]
    %v400 = vld [vmem:[#allocation7 + $0x20] sm:$0xff]
    %v401 = vld [vmem:[#allocation7 + $0x28] sm:$0xff]
    %v402 = vld [vmem:[#allocation7 + $0x30] sm:$0xff]
    %v403 = vld [vmem:[#allocation7 + $0x38] sm:$0xff]
    %v404 = vld [vmem:[#allocation7 + $0x40] sm:$0xff]
    %v405 = vld [vmem:[#allocation7 + $0x48] sm:$0xff]
    %v406 = vld [vmem:[#allocation7 + $0x50] sm:$0xff]
    %v407 = vld [vmem:[#allocation7 + $0x58] sm:$0xff]
    %v408 = vld [vmem:[#allocation7 + $0x60] sm:$0xff]
    %v409 = vld [vmem:[#allocation7 + $0x68] sm:$0xff]
    %v410 = vld [vmem:[#allocation7 + $0x70] sm:$0xff]
    %v411 = vld [vmem:[#allocation7 + $0x78] sm:$0xff]
    %v412 = vld [vmem:[%s6] sm:$0x1]
    %v414 = vlaneseq
    %v415 = vshrl.u32 %v414, 7
    %v416 = vsub.s32 0, %v415
    %v417 = vrot.slane %v412, %v416
    %419 = vmatprep.subr.mxu0 0.0
    %420 = vmatpush1.msra.mxu0 %v396
    %421 = vmatprep.subr.mxu0 0.0
    %422 = vmatpush1.msra.mxu0 %v397
    %423 = vmatprep.subr.mxu0 0.0
    %424 = vmatpush1.msra.mxu0 %v398
    %425 = vmatprep.subr.mxu0 0.0
    %426 = vmatpush1.msra.mxu0 %v399
    %427 = vmatprep.subr.mxu0 0.0
    %428 = vmatpush1.msra.mxu0 %v400
    %429 = vmatprep.subr.mxu0 0.0
    %430 = vmatpush1.msra.mxu0 %v401
    %431 = vmatprep.subr.mxu0 0.0
    %432 = vmatpush1.msra.mxu0 %v402
    %433 = vmatprep.subr.mxu0 0.0
    %434 = vmatpush1.msra.mxu0 %v403
    %435 = vmatprep.subr.mxu0 0.0
    %436 = vmatpush1.msra.mxu0 %v404
    %437 = vmatprep.subr.mxu0 0.0
    %438 = vmatpush1.msra.mxu0 %v405
    %439 = vmatprep.subr.mxu0 0.0
    %440 = vmatpush1.msra.mxu0 %v406
    %441 = vmatprep.subr.mxu0 0.0
    %442 = vmatpush1.msra.mxu0 %v407
    %443 = vmatprep.subr.mxu0 0.0
    %444 = vmatpush1.msra.mxu0 %v408
    %445 = vmatprep.subr.mxu0 0.0
    %446 = vmatpush1.msra.mxu0 %v409
    %447 = vmatprep.subr.mxu0 0.0
    %448 = vmatpush1.msra.mxu0 %v410
    %449 = vmatprep.subr.mxu0 0.0
    %450 = vmatpush1.msra.mxu0 %v411
    %451 = vmatprep.subr.mxu0 0.0
    %452 = vmatpush1.msra.mxu0 0.0
    %453 = vmatprep.subr.mxu0 0.0
    %454 = vmatpush1.msra.mxu0 0.0
    %455 = vmatprep.subr.mxu0 0.0
    %456 = vmatpush1.msra.mxu0 0.0
    %457 = vmatprep.subr.mxu0 0.0
    %458 = vmatpush1.msra.mxu0 0.0
    %459 = vmatprep.subr.mxu0 0.0
    %460 = vmatpush1.msra.mxu0 0.0
    %461 = vmatprep.subr.mxu0 0.0
    %462 = vmatpush1.msra.mxu0 0.0
    %463 = vmatprep.subr.mxu0 0.0
    %464 = vmatpush1.msra.mxu0 0.0
    %465 = vmatprep.subr.mxu0 0.0
    %466 = vmatpush1.msra.mxu0 0.0
    %467 = vmatprep.subr.mxu0 0.0
    %468 = vmatpush1.msra.mxu0 0.0
    %469 = vmatprep.subr.mxu0 0.0
    %470 = vmatpush1.msra.mxu0 0.0
    %471 = vmatprep.subr.mxu0 0.0
    %472 = vmatpush1.msra.mxu0 0.0
    %473 = vmatprep.subr.mxu0 0.0
    %474 = vmatpush1.msra.mxu0 0.0
    %475 = vmatprep.subr.mxu0 0.0
    %476 = vmatpush1.msra.mxu0 0.0
    %477 = vmatprep.subr.mxu0 0.0
    %478 = vmatpush1.msra.mxu0 0.0
    %479 = vmatprep.subr.mxu0 0.0
    %480 = vmatpush1.msra.mxu0 0.0
    %481 = vmatprep.subr.mxu0 0.0
    %482 = vmatpush1.msra.mxu0 0.0
    %483 = vmatprep.mubr.f32.mxu0 0.0
    %484 = vmatmul.mubr.f32.gmra.mrb[0].mxu0 %v395
    %v485 = vpop.f32.mrb[0].mxu0
    %v486 = vadd.f32 %v417, %v485
    %v487 = vpop.f32.mrb[0].mxu0
    %488 = vdwg.mxu0
    %v489 = vmax.f32 %v486, 0.0
    %v490 = vld [vmem:[#allocation8] sm:$0xff]
    %v491 = vld [vmem:[#allocation8 + $0x8] sm:$0xff]
    %v492 = vld [vmem:[#allocation8 + $0x10] sm:$0xff]
    %v493 = vld [vmem:[#allocation8 + $0x18] sm:$0xff]
    %v494 = vld [vmem:[#allocation8 + $0x20] sm:$0xff]
    %v495 = vld [vmem:[#allocation8 + $0x28] sm:$0xff]
    %v496 = vld [vmem:[#allocation8 + $0x30] sm:$0xff]
    %v497 = vld [vmem:[#allocation8 + $0x38] sm:$0xff]
    %v498 = vld [vmem:[#allocation8 + $0x40] sm:$0xff]
    %v499 = vld [vmem:[#allocation8 + $0x48] sm:$0xff]
    %v500 = vld [vmem:[#allocation8 + $0x50] sm:$0xff]
    %v501 = vld [vmem:[#allocation8 + $0x58] sm:$0xff]
    %v502 = vld [vmem:[#allocation8 + $0x60] sm:$0xff]
    %v503 = vld [vmem:[#allocation8 + $0x68] sm:$0xff]
    %v504 = vld [vmem:[#allocation8 + $0x70] sm:$0xff]
    %v505 = vld [vmem:[#allocation8 + $0x78] sm:$0xff]
    %v506 = vld [vmem:[%s8] sm:$0x1]
    %v508 = vlaneseq
    %v509 = vshrl.u32 %v508, 7
    %v510 = vsub.s32 0, %v509
    %v511 = vrot.slane %v506, %v510
    %513 = vmatprep.subr.mxu0 0.0
    %514 = vmatpush1.msra.mxu0 %v490
    %515 = vmatprep.subr.mxu0 0.0
    %516 = vmatpush1.msra.mxu0 %v491
    %517 = vmatprep.subr.mxu0 0.0
    %518 = vmatpush1.msra.mxu0 %v492
    %519 = vmatprep.subr.mxu0 0.0
    %520 = vmatpush1.msra.mxu0 %v493
    %521 = vmatprep.subr.mxu0 0.0
    %522 = vmatpush1.msra.mxu0 %v494
    %523 = vmatprep.subr.mxu0 0.0
    %524 = vmatpush1.msra.mxu0 %v495
    %525 = vmatprep.subr.mxu0 0.0
    %526 = vmatpush1.msra.mxu0 %v496
    %527 = vmatprep.subr.mxu0 0.0
    %528 = vmatpush1.msra.mxu0 %v497
    %529 = vmatprep.subr.mxu0 0.0
    %530 = vmatpush1.msra.mxu0 %v498
    %531 = vmatprep.subr.mxu0 0.0
    %532 = vmatpush1.msra.mxu0 %v499
    %533 = vmatprep.subr.mxu0 0.0
    %534 = vmatpush1.msra.mxu0 %v500
    %535 = vmatprep.subr.mxu0 0.0
    %536 = vmatpush1.msra.mxu0 %v501
    %537 = vmatprep.subr.mxu0 0.0
    %538 = vmatpush1.msra.mxu0 %v502
    %539 = vmatprep.subr.mxu0 0.0
    %540 = vmatpush1.msra.mxu0 %v503
    %541 = vmatprep.subr.mxu0 0.0
    %542 = vmatpush1.msra.mxu0 %v504
    %543 = vmatprep.subr.mxu0 0.0
    %544 = vmatpush1.msra.mxu0 %v505
    %545 = vmatprep.subr.mxu0 0.0
    %546 = vmatpush1.msra.mxu0 0.0
    %547 = vmatprep.subr.mxu0 0.0
    %548 = vmatpush1.msra.mxu0 0.0
    %549 = vmatprep.subr.mxu0 0.0
    %550 = vmatpush1.msra.mxu0 0.0
    %551 = vmatprep.subr.mxu0 0.0
    %552 = vmatpush1.msra.mxu0 0.0
    %553 = vmatprep.subr.mxu0 0.0
    %554 = vmatpush1.msra.mxu0 0.0
    %555 = vmatprep.subr.mxu0 0.0
    %556 = vmatpush1.msra.mxu0 0.0
    %557 = vmatprep.subr.mxu0 0.0
    %558 = vmatpush1.msra.mxu0 0.0
    %559 = vmatprep.subr.mxu0 0.0
    %560 = vmatpush1.msra.mxu0 0.0
    %561 = vmatprep.subr.mxu0 0.0
    %562 = vmatpush1.msra.mxu0 0.0
    %563 = vmatprep.subr.mxu0 0.0
    %564 = vmatpush1.msra.mxu0 0.0
    %565 = vmatprep.subr.mxu0 0.0
    %566 = vmatpush1.msra.mxu0 0.0
    %567 = vmatprep.subr.mxu0 0.0
    %568 = vmatpush1.msra.mxu0 0.0
    %569 = vmatprep.subr.mxu0 0.0
    %570 = vmatpush1.msra.mxu0 0.0
    %571 = vmatprep.subr.mxu0 0.0
    %572 = vmatpush1.msra.mxu0 0.0
    %573 = vmatprep.subr.mxu0 0.0
    %574 = vmatpush1.msra.mxu0 0.0
    %575 = vmatprep.subr.mxu0 0.0
    %576 = vmatpush1.msra.mxu0 0.0
    %577 = vmatprep.mubr.f32.mxu0 0.0
    %578 = vmatmul.mubr.f32.gmra.mrb[0].mxu0 %v489
    %v579 = vpop.f32.mrb[0].mxu0
    %v580 = vadd.f32 %v511, %v579
    %v581 = vpop.f32.mrb[0].mxu0
    %582 = vdwg.mxu0
    %v583 = vmax.f32 %v580, 0.0
    %v584 = vld [vmem:[#allocation10] sm:$0xff]
    %v585 = vld [vmem:[#allocation10 + $0x8] sm:$0xff]
    %v586 = vld [vmem:[#allocation10 + $0x10] sm:$0xff]
    %v587 = vld [vmem:[#allocation10 + $0x18] sm:$0xff]
    %v588 = vld [vmem:[#allocation10 + $0x20] sm:$0xff]
    %v589 = vld [vmem:[#allocation10 + $0x28] sm:$0xff]
    %v590 = vld [vmem:[#allocation10 + $0x30] sm:$0xff]
    %v591 = vld [vmem:[#allocation10 + $0x38] sm:$0xff]
    %v592 = vld [vmem:[#allocation10 + $0x40] sm:$0xff]
    %v593 = vld [vmem:[#allocation10 + $0x48] sm:$0xff]
    %v594 = vld [vmem:[#allocation10 + $0x50] sm:$0xff]
    %v595 = vld [vmem:[#allocation10 + $0x58] sm:$0xff]
    %v596 = vld [vmem:[#allocation10 + $0x60] sm:$0xff]
    %v597 = vld [vmem:[#allocation10 + $0x68] sm:$0xff]
    %v598 = vld [vmem:[#allocation10 + $0x70] sm:$0xff]
    %v599 = vld [vmem:[#allocation10 + $0x78] sm:$0xff]
    %v600 = vld [vmem:[%s10] sm:$0x1]
    %v602 = vlaneseq
    %v603 = vshrl.u32 %v602, 7
    %v604 = vsub.s32 0, %v603
    %v605 = vrot.slane %v600, %v604
    %607 = vmatprep.subr.mxu0 0.0
    %608 = vmatpush1.msra.mxu0 %v584
    %609 = vmatprep.subr.mxu0 0.0
    %610 = vmatpush1.msra.mxu0 %v585
    %611 = vmatprep.subr.mxu0 0.0
    %612 = vmatpush1.msra.mxu0 %v586
    %613 = vmatprep.subr.mxu0 0.0
    %614 = vmatpush1.msra.mxu0 %v587
    %615 = vmatprep.subr.mxu0 0.0
    %616 = vmatpush1.msra.mxu0 %v588
    %617 = vmatprep.subr.mxu0 0.0
    %618 = vmatpush1.msra.mxu0 %v589
    %619 = vmatprep.subr.mxu0 0.0
    %620 = vmatpush1.msra.mxu0 %v590
    %621 = vmatprep.subr.mxu0 0.0
    %622 = vmatpush1.msra.mxu0 %v591
    %623 = vmatprep.subr.mxu0 0.0
    %624 = vmatpush1.msra.mxu0 %v592
    %625 = vmatprep.subr.mxu0 0.0
    %626 = vmatpush1.msra.mxu0 %v593
    %627 = vmatprep.subr.mxu0 0.0
    %628 = vmatpush1.msra.mxu0 %v594
    %629 = vmatprep.subr.mxu0 0.0
    %630 = vmatpush1.msra.mxu0 %v595
    %631 = vmatprep.subr.mxu0 0.0
    %632 = vmatpush1.msra.mxu0 %v596
    %633 = vmatprep.subr.mxu0 0.0
    %634 = vmatpush1.msra.mxu0 %v597
    %635 = vmatprep.subr.mxu0 0.0
    %636 = vmatpush1.msra.mxu0 %v598
    %637 = vmatprep.subr.mxu0 0.0
    %638 = vmatpush1.msra.mxu0 %v599
    %639 = vmatprep.subr.mxu0 0.0
    %640 = vmatpush1.msra.mxu0 0.0
    %641 = vmatprep.subr.mxu0 0.0
    %642 = vmatpush1.msra.mxu0 0.0
    %643 = vmatprep.subr.mxu0 0.0
    %644 = vmatpush1.msra.mxu0 0.0
    %645 = vmatprep.subr.mxu0 0.0
    %646 = vmatpush1.msra.mxu0 0.0
    %647 = vmatprep.subr.mxu0 0.0
    %648 = vmatpush1.msra.mxu0 0.0
    %649 = vmatprep.subr.mxu0 0.0
    %650 = vmatpush1.msra.mxu0 0.0
    %651 = vmatprep.subr.mxu0 0.0
    %652 = vmatpush1.msra.mxu0 0.0
    %653 = vmatprep.subr.mxu0 0.0
    %654 = vmatpush1.msra.mxu0 0.0
    %655 = vmatprep.subr.mxu0 0.0
    %656 = vmatpush1.msra.mxu0 0.0
    %657 = vmatprep.subr.mxu0 0.0
    %658 = vmatpush1.msra.mxu0 0.0
    %659 = vmatprep.subr.mxu0 0.0
    %660 = vmatpush1.msra.mxu0 0.0
    %661 = vmatprep.subr.mxu0 0.0
    %662 = vmatpush1.msra.mxu0 0.0
    %663 = vmatprep.subr.mxu0 0.0
    %664 = vmatpush1.msra.mxu0 0.0
    %665 = vmatprep.subr.mxu0 0.0
    %666 = vmatpush1.msra.mxu0 0.0
    %667 = vmatprep.subr.mxu0 0.0
    %668 = vmatpush1.msra.mxu0 0.0
    %669 = vmatprep.subr.mxu0 0.0
    %670 = vmatpush1.msra.mxu0 0.0
    %671 = vmatprep.mubr.f32.mxu0 0.0
    %672 = vmatmul.mubr.f32.gmra.mrb[0].mxu0 %v583
    %v673 = vpop.f32.mrb[0].mxu0
    %v674 = vadd.f32 %v605, %v673
    %v675 = vpop.f32.mrb[0].mxu0
    %676 = vdwg.mxu0
    %677 = vst [vmem:[%s21] sm:$0xff] %v674
    %v678 = vld [vmem:[#allocation11] sm:$0xff]
    %v679 = vld [vmem:[#allocation11 + $0x8] sm:$0xff]
    %v680 = vld [vmem:[#allocation11 + $0x10] sm:$0xff]
    %v681 = vld [vmem:[#allocation11 + $0x18] sm:$0xff]
    %v682 = vld [vmem:[#allocation11 + $0x20] sm:$0xff]
    %v683 = vld [vmem:[#allocation11 + $0x28] sm:$0xff]
    %v684 = vld [vmem:[#allocation11 + $0x30] sm:$0xff]
    %v685 = vld [vmem:[#allocation11 + $0x38] sm:$0xff]
    %v686 = vld [vmem:[#allocation11 + $0x40] sm:$0xff]
    %v687 = vld [vmem:[#allocation11 + $0x48] sm:$0xff]
    %v688 = vld [vmem:[#allocation11 + $0x50] sm:$0xff]
    %v689 = vld [vmem:[#allocation11 + $0x58] sm:$0xff]
    %v690 = vld [vmem:[#allocation11 + $0x60] sm:$0xff]
    %v691 = vld [vmem:[#allocation11 + $0x68] sm:$0xff]
    %v692 = vld [vmem:[#allocation11 + $0x70] sm:$0xff]
    %v693 = vld [vmem:[#allocation11 + $0x78] sm:$0xff]
    %v694 = vld [vmem:[%s12] sm:$0x1]
    %v696 = vlaneseq
    %v697 = vshrl.u32 %v696, 7
    %v698 = vsub.s32 0, %v697
    %v699 = vrot.slane %v694, %v698
    %701 = vmatprep.subr.mxu0 0.0
    %702 = vmatpush1.msra.mxu0 %v678
    %703 = vmatprep.subr.mxu0 0.0
    %704 = vmatpush1.msra.mxu0 %v679
    %705 = vmatprep.subr.mxu0 0.0
    %706 = vmatpush1.msra.mxu0 %v680
    %707 = vmatprep.subr.mxu0 0.0
    %708 = vmatpush1.msra.mxu0 %v681
    %709 = vmatprep.subr.mxu0 0.0
    %710 = vmatpush1.msra.mxu0 %v682
    %711 = vmatprep.subr.mxu0 0.0
    %712 = vmatpush1.msra.mxu0 %v683
    %713 = vmatprep.subr.mxu0 0.0
    %714 = vmatpush1.msra.mxu0 %v684
    %715 = vmatprep.subr.mxu0 0.0
    %716 = vmatpush1.msra.mxu0 %v685
    %717 = vmatprep.subr.mxu0 0.0
    %718 = vmatpush1.msra.mxu0 %v686
    %719 = vmatprep.subr.mxu0 0.0
    %720 = vmatpush1.msra.mxu0 %v687
    %721 = vmatprep.subr.mxu0 0.0
    %722 = vmatpush1.msra.mxu0 %v688
    %723 = vmatprep.subr.mxu0 0.0
    %724 = vmatpush1.msra.mxu0 %v689
    %725 = vmatprep.subr.mxu0 0.0
    %726 = vmatpush1.msra.mxu0 %v690
    %727 = vmatprep.subr.mxu0 0.0
    %728 = vmatpush1.msra.mxu0 %v691
    %729 = vmatprep.subr.mxu0 0.0
    %730 = vmatpush1.msra.mxu0 %v692
    %731 = vmatprep.subr.mxu0 0.0
    %732 = vmatpush1.msra.mxu0 %v693
    %733 = vmatprep.subr.mxu0 0.0
    %734 = vmatpush1.msra.mxu0 0.0
    %735 = vmatprep.subr.mxu0 0.0
    %736 = vmatpush1.msra.mxu0 0.0
    %737 = vmatprep.subr.mxu0 0.0
    %738 = vmatpush1.msra.mxu0 0.0
    %739 = vmatprep.subr.mxu0 0.0
    %740 = vmatpush1.msra.mxu0 0.0
    %741 = vmatprep.subr.mxu0 0.0
    %742 = vmatpush1.msra.mxu0 0.0
    %743 = vmatprep.subr.mxu0 0.0
    %744 = vmatpush1.msra.mxu0 0.0
    %745 = vmatprep.subr.mxu0 0.0
    %746 = vmatpush1.msra.mxu0 0.0
    %747 = vmatprep.subr.mxu0 0.0
    %748 = vmatpush1.msra.mxu0 0.0
    %749 = vmatprep.subr.mxu0 0.0
    %750 = vmatpush1.msra.mxu0 0.0
    %751 = vmatprep.subr.mxu0 0.0
    %752 = vmatpush1.msra.mxu0 0.0
    %753 = vmatprep.subr.mxu0 0.0
    %754 = vmatpush1.msra.mxu0 0.0
    %755 = vmatprep.subr.mxu0 0.0
    %756 = vmatpush1.msra.mxu0 0.0
    %757 = vmatprep.subr.mxu0 0.0
    %758 = vmatpush1.msra.mxu0 0.0
    %759 = vmatprep.subr.mxu0 0.0
    %760 = vmatpush1.msra.mxu0 0.0
    %761 = vmatprep.subr.mxu0 0.0
    %762 = vmatpush1.msra.mxu0 0.0
    %763 = vmatprep.subr.mxu0 0.0
    %764 = vmatpush1.msra.mxu0 0.0
    %765 = vmatprep.mubr.f32.mxu0 0.0
    %766 = vmatmul.mubr.f32.gmra.mrb[0].mxu0 %v674
    %v767 = vpop.f32.mrb[0].mxu0
    %v768 = vadd.f32 %v699, %v767
    %v769 = vpop.f32.mrb[0].mxu0
    %770 = vdwg.mxu0
    %v771 = vmax.f32 %v768, 0.0
    %v772 = vld [vmem:[#allocation13] sm:$0xff]
    %v773 = vld [vmem:[#allocation13 + $0x8] sm:$0xff]
    %v774 = vld [vmem:[#allocation13 + $0x10] sm:$0xff]
    %v775 = vld [vmem:[#allocation13 + $0x18] sm:$0xff]
    %v776 = vld [vmem:[#allocation13 + $0x20] sm:$0xff]
    %v777 = vld [vmem:[#allocation13 + $0x28] sm:$0xff]
    %v778 = vld [vmem:[#allocation13 + $0x30] sm:$0xff]
    %v779 = vld [vmem:[#allocation13 + $0x38] sm:$0xff]
    %v780 = vld [vmem:[#allocation13 + $0x40] sm:$0xff]
    %v781 = vld [vmem:[#allocation13 + $0x48] sm:$0xff]
    %v782 = vld [vmem:[#allocation13 + $0x50] sm:$0xff]
    %v783 = vld [vmem:[#allocation13 + $0x58] sm:$0xff]
    %v784 = vld [vmem:[#allocation13 + $0x60] sm:$0xff]
    %v785 = vld [vmem:[#allocation13 + $0x68] sm:$0xff]
    %v786 = vld [vmem:[#allocation13 + $0x70] sm:$0xff]
    %v787 = vld [vmem:[#allocation13 + $0x78] sm:$0xff]
    %v788 = vld [vmem:[%s14] sm:$0x1]
    %v790 = vlaneseq
    %v791 = vshrl.u32 %v790, 7
    %v792 = vsub.s32 0, %v791
    %v793 = vrot.slane %v788, %v792
    %795 = vmatprep.subr.mxu0 0.0
    %796 = vmatpush1.msra.mxu0 %v772
    %797 = vmatprep.subr.mxu0 0.0
    %798 = vmatpush1.msra.mxu0 %v773
    %799 = vmatprep.subr.mxu0 0.0
    %800 = vmatpush1.msra.mxu0 %v774
    %801 = vmatprep.subr.mxu0 0.0
    %802 = vmatpush1.msra.mxu0 %v775
    %803 = vmatprep.subr.mxu0 0.0
    %804 = vmatpush1.msra.mxu0 %v776
    %805 = vmatprep.subr.mxu0 0.0
    %806 = vmatpush1.msra.mxu0 %v777
    %807 = vmatprep.subr.mxu0 0.0
    %808 = vmatpush1.msra.mxu0 %v778
    %809 = vmatprep.subr.mxu0 0.0
    %810 = vmatpush1.msra.mxu0 %v779
    %811 = vmatprep.subr.mxu0 0.0
    %812 = vmatpush1.msra.mxu0 %v780
    %813 = vmatprep.subr.mxu0 0.0
    %814 = vmatpush1.msra.mxu0 %v781
    %815 = vmatprep.subr.mxu0 0.0
    %816 = vmatpush1.msra.mxu0 %v782
    %817 = vmatprep.subr.mxu0 0.0
    %818 = vmatpush1.msra.mxu0 %v783
    %819 = vmatprep.subr.mxu0 0.0
    %820 = vmatpush1.msra.mxu0 %v784
    %821 = vmatprep.subr.mxu0 0.0
    %822 = vmatpush1.msra.mxu0 %v785
    %823 = vmatprep.subr.mxu0 0.0
    %824 = vmatpush1.msra.mxu0 %v786
    %825 = vmatprep.subr.mxu0 0.0
    %826 = vmatpush1.msra.mxu0 %v787
    %827 = vmatprep.subr.mxu0 0.0
    %828 = vmatpush1.msra.mxu0 0.0
    %829 = vmatprep.subr.mxu0 0.0
    %830 = vmatpush1.msra.mxu0 0.0
    %831 = vmatprep.subr.mxu0 0.0
    %832 = vmatpush1.msra.mxu0 0.0
    %833 = vmatprep.subr.mxu0 0.0
    %834 = vmatpush1.msra.mxu0 0.0
    %835 = vmatprep.subr.mxu0 0.0
    %836 = vmatpush1.msra.mxu0 0.0
    %837 = vmatprep.subr.mxu0 0.0
    %838 = vmatpush1.msra.mxu0 0.0
    %839 = vmatprep.subr.mxu0 0.0
    %840 = vmatpush1.msra.mxu0 0.0
    %841 = vmatprep.subr.mxu0 0.0
    %842 = vmatpush1.msra.mxu0 0.0
    %843 = vmatprep.subr.mxu0 0.0
    %844 = vmatpush1.msra.mxu0 0.0
    %845 = vmatprep.subr.mxu0 0.0
    %846 = vmatpush1.msra.mxu0 0.0
    %847 = vmatprep.subr.mxu0 0.0
    %848 = vmatpush1.msra.mxu0 0.0
    %849 = vmatprep.subr.mxu0 0.0
    %850 = vmatpush1.msra.mxu0 0.0
    %851 = vmatprep.subr.mxu0 0.0
    %852 = vmatpush1.msra.mxu0 0.0
    %853 = vmatprep.subr.mxu0 0.0
    %854 = vmatpush1.msra.mxu0 0.0
    %855 = vmatprep.subr.mxu0 0.0
    %856 = vmatpush1.msra.mxu0 0.0
    %857 = vmatprep.subr.mxu0 0.0
    %858 = vmatpush1.msra.mxu0 0.0
    %859 = vmatprep.mubr.f32.mxu0 0.0
    %860 = vmatmul.mubr.f32.gmra.mrb[0].mxu0 %v771
    %v861 = vpop.f32.mrb[0].mxu0
    %v862 = vadd.f32 %v793, %v861
    %v863 = vpop.f32.mrb[0].mxu0
    %864 = vdwg.mxu0
    %v865 = vmax.f32 %v862, 0.0
    %v866 = vld [vmem:[#allocation14] sm:$0xff]
    %v867 = vld [vmem:[#allocation14 + $0x8] sm:$0xff]
    %v868 = vld [vmem:[#allocation14 + $0x10] sm:$0xff]
    %v869 = vld [vmem:[#allocation14 + $0x18] sm:$0xff]
    %v870 = vld [vmem:[#allocation14 + $0x20] sm:$0xff]
    %v871 = vld [vmem:[#allocation14 + $0x28] sm:$0xff]
    %v872 = vld [vmem:[#allocation14 + $0x30] sm:$0xff]
    %v873 = vld [vmem:[#allocation14 + $0x38] sm:$0xff]
    %v874 = vld [vmem:[#allocation14 + $0x40] sm:$0xff]
    %v875 = vld [vmem:[#allocation14 + $0x48] sm:$0xff]
    %v876 = vld [vmem:[#allocation14 + $0x50] sm:$0xff]
    %v877 = vld [vmem:[#allocation14 + $0x58] sm:$0xff]
    %v878 = vld [vmem:[#allocation14 + $0x60] sm:$0xff]
    %v879 = vld [vmem:[#allocation14 + $0x68] sm:$0xff]
    %v880 = vld [vmem:[#allocation14 + $0x70] sm:$0xff]
    %v881 = vld [vmem:[#allocation14 + $0x78] sm:$0xff]
    %v882 = vld [vmem:[%s16] sm:$0x1]
    %v884 = vlaneseq
    %v885 = vshrl.u32 %v884, 7
    %v886 = vsub.s32 0, %v885
    %v887 = vrot.slane %v882, %v886
    %889 = vmatprep.subr.mxu0 0.0
    %890 = vmatpush1.msra.mxu0 %v866
    %891 = vmatprep.subr.mxu0 0.0
    %892 = vmatpush1.msra.mxu0 %v867
    %893 = vmatprep.subr.mxu0 0.0
    %894 = vmatpush1.msra.mxu0 %v868
    %895 = vmatprep.subr.mxu0 0.0
    %896 = vmatpush1.msra.mxu0 %v869
    %897 = vmatprep.subr.mxu0 0.0
    %898 = vmatpush1.msra.mxu0 %v870
    %899 = vmatprep.subr.mxu0 0.0
    %900 = vmatpush1.msra.mxu0 %v871
    %901 = vmatprep.subr.mxu0 0.0
    %902 = vmatpush1.msra.mxu0 %v872
    %903 = vmatprep.subr.mxu0 0.0
    %904 = vmatpush1.msra.mxu0 %v873
    %905 = vmatprep.subr.mxu0 0.0
    %906 = vmatpush1.msra.mxu0 %v874
    %907 = vmatprep.subr.mxu0 0.0
    %908 = vmatpush1.msra.mxu0 %v875
    %909 = vmatprep.subr.mxu0 0.0
    %910 = vmatpush1.msra.mxu0 %v876
    %911 = vmatprep.subr.mxu0 0.0
    %912 = vmatpush1.msra.mxu0 %v877
    %913 = vmatprep.subr.mxu0 0.0
    %914 = vmatpush1.msra.mxu0 %v878
    %915 = vmatprep.subr.mxu0 0.0
    %916 = vmatpush1.msra.mxu0 %v879
    %917 = vmatprep.subr.mxu0 0.0
    %918 = vmatpush1.msra.mxu0 %v880
    %919 = vmatprep.subr.mxu0 0.0
    %920 = vmatpush1.msra.mxu0 %v881
    %921 = vmatprep.subr.mxu0 0.0
    %922 = vmatpush1.msra.mxu0 0.0
    %923 = vmatprep.subr.mxu0 0.0
    %924 = vmatpush1.msra.mxu0 0.0
    %925 = vmatprep.subr.mxu0 0.0
    %926 = vmatpush1.msra.mxu0 0.0
    %927 = vmatprep.subr.mxu0 0.0
    %928 = vmatpush1.msra.mxu0 0.0
    %929 = vmatprep.subr.mxu0 0.0
    %930 = vmatpush1.msra.mxu0 0.0
    %931 = vmatprep.subr.mxu0 0.0
    %932 = vmatpush1.msra.mxu0 0.0
    %933 = vmatprep.subr.mxu0 0.0
    %934 = vmatpush1.msra.mxu0 0.0
    %935 = vmatprep.subr.mxu0 0.0
    %936 = vmatpush1.msra.mxu0 0.0
    %937 = vmatprep.subr.mxu0 0.0
    %938 = vmatpush1.msra.mxu0 0.0
    %939 = vmatprep.subr.mxu0 0.0
    %940 = vmatpush1.msra.mxu0 0.0
    %941 = vmatprep.subr.mxu0 0.0
    %942 = vmatpush1.msra.mxu0 0.0
    %943 = vmatprep.subr.mxu0 0.0
    %944 = vmatpush1.msra.mxu0 0.0
    %945 = vmatprep.subr.mxu0 0.0
    %946 = vmatpush1.msra.mxu0 0.0
    %947 = vmatprep.subr.mxu0 0.0
    %948 = vmatpush1.msra.mxu0 0.0
    %949 = vmatprep.subr.mxu0 0.0
    %950 = vmatpush1.msra.mxu0 0.0
    %951 = vmatprep.subr.mxu0 0.0
    %952 = vmatpush1.msra.mxu0 0.0
    %953 = vmatprep.mubr.f32.mxu0 0.0
    %954 = vmatmul.mubr.f32.gmra.mrb[0].mxu0 %v865
    %v955 = vpop.f32.mrb[0].mxu0
    %v956 = vadd.f32 %v887, %v955
    %v957 = vpop.f32.mrb[0].mxu0
    %958 = vdwg.mxu0
    %v959 = vmax.f32 %v956, 0.0
    %v960 = vld [vmem:[#allocation16] sm:$0xff]
    %v961 = vld [vmem:[#allocation16 + $0x8] sm:$0xff]
    %v962 = vld [vmem:[#allocation16 + $0x10] sm:$0xff]
    %v963 = vld [vmem:[#allocation16 + $0x18] sm:$0xff]
    %v964 = vld [vmem:[#allocation16 + $0x20] sm:$0xff]
    %v965 = vld [vmem:[#allocation16 + $0x28] sm:$0xff]
    %v966 = vld [vmem:[#allocation16 + $0x30] sm:$0xff]
    %v967 = vld [vmem:[#allocation16 + $0x38] sm:$0xff]
    %v968 = vld [vmem:[#allocation16 + $0x40] sm:$0xff]
    %v969 = vld [vmem:[#allocation16 + $0x48] sm:$0xff]
    %v970 = vld [vmem:[#allocation16 + $0x50] sm:$0xff]
    %v971 = vld [vmem:[#allocation16 + $0x58] sm:$0xff]
    %v972 = vld [vmem:[#allocation16 + $0x60] sm:$0xff]
    %v973 = vld [vmem:[#allocation16 + $0x68] sm:$0xff]
    %v974 = vld [vmem:[#allocation16 + $0x70] sm:$0xff]
    %v975 = vld [vmem:[#allocation16 + $0x78] sm:$0xff]
    %v976 = vld [vmem:[%s18] sm:$0x1]
    %v978 = vlaneseq
    %v979 = vshrl.u32 %v978, 7
    %v980 = vsub.s32 0, %v979
    %v981 = vrot.slane %v976, %v980
    %983 = vmatprep.subr.mxu0 0.0
    %984 = vmatpush1.msra.mxu0 %v960
    %985 = vmatprep.subr.mxu0 0.0
    %986 = vmatpush1.msra.mxu0 %v961
    %987 = vmatprep.subr.mxu0 0.0
    %988 = vmatpush1.msra.mxu0 %v962
    %989 = vmatprep.subr.mxu0 0.0
    %990 = vmatpush1.msra.mxu0 %v963
    %991 = vmatprep.subr.mxu0 0.0
    %992 = vmatpush1.msra.mxu0 %v964
    %993 = vmatprep.subr.mxu0 0.0
    %994 = vmatpush1.msra.mxu0 %v965
    %995 = vmatprep.subr.mxu0 0.0
    %996 = vmatpush1.msra.mxu0 %v966
    %997 = vmatprep.subr.mxu0 0.0
    %998 = vmatpush1.msra.mxu0 %v967
    %999 = vmatprep.subr.mxu0 0.0
    %1000 = vmatpush1.msra.mxu0 %v968
    %1001 = vmatprep.subr.mxu0 0.0
    %1002 = vmatpush1.msra.mxu0 %v969
    %1003 = vmatprep.subr.mxu0 0.0
    %1004 = vmatpush1.msra.mxu0 %v970
    %1005 = vmatprep.subr.mxu0 0.0
    %1006 = vmatpush1.msra.mxu0 %v971
    %1007 = vmatprep.subr.mxu0 0.0
    %1008 = vmatpush1.msra.mxu0 %v972
    %1009 = vmatprep.subr.mxu0 0.0
    %1010 = vmatpush1.msra.mxu0 %v973
    %1011 = vmatprep.subr.mxu0 0.0
    %1012 = vmatpush1.msra.mxu0 %v974
    %1013 = vmatprep.subr.mxu0 0.0
    %1014 = vmatpush1.msra.mxu0 %v975
    %1015 = vmatprep.subr.mxu0 0.0
    %1016 = vmatpush1.msra.mxu0 0.0
    %1017 = vmatprep.subr.mxu0 0.0
    %1018 = vmatpush1.msra.mxu0 0.0
    %1019 = vmatprep.subr.mxu0 0.0
    %1020 = vmatpush1.msra.mxu0 0.0
    %1021 = vmatprep.subr.mxu0 0.0
    %1022 = vmatpush1.msra.mxu0 0.0
    %1023 = vmatprep.subr.mxu0 0.0
    %1024 = vmatpush1.msra.mxu0 0.0
    %1025 = vmatprep.subr.mxu0 0.0
    %1026 = vmatpush1.msra.mxu0 0.0
    %1027 = vmatprep.subr.mxu0 0.0
    %1028 = vmatpush1.msra.mxu0 0.0
    %1029 = vmatprep.subr.mxu0 0.0
    %1030 = vmatpush1.msra.mxu0 0.0
    %1031 = vmatprep.subr.mxu0 0.0
    %1032 = vmatpush1.msra.mxu0 0.0
    %1033 = vmatprep.subr.mxu0 0.0
    %1034 = vmatpush1.msra.mxu0 0.0
    %1035 = vmatprep.subr.mxu0 0.0
    %1036 = vmatpush1.msra.mxu0 0.0
    %1037 = vmatprep.subr.mxu0 0.0
    %1038 = vmatpush1.msra.mxu0 0.0
    %1039 = vmatprep.subr.mxu0 0.0
    %1040 = vmatpush1.msra.mxu0 0.0
    %1041 = vmatprep.subr.mxu0 0.0
    %1042 = vmatpush1.msra.mxu0 0.0
    %1043 = vmatprep.subr.mxu0 0.0
    %1044 = vmatpush1.msra.mxu0 0.0
    %1045 = vmatprep.subr.mxu0 0.0
    %1046 = vmatpush1.msra.mxu0 0.0
    %1047 = vmatprep.mubr.f32.mxu0 0.0
    %1048 = vmatmul.mubr.f32.gmra.mrb[0].mxu0 %v959
    %v1049 = vpop.f32.mrb[0].mxu0
    %v1050 = vadd.f32 %v981, %v1049
    %v1051 = vpop.f32.mrb[0].mxu0
    %1052 = vdwg.mxu0
    %v1053 = vmax.f32 %v1050, 0.0
    %v1054 = vld [vmem:[#allocation17] sm:$0xff]
    %v1055 = vld [vmem:[#allocation17 + $0x8] sm:$0xff]
    %v1056 = vld [vmem:[#allocation17 + $0x10] sm:$0xff]
    %v1057 = vld [vmem:[#allocation17 + $0x18] sm:$0xff]
    %v1058 = vld [vmem:[#allocation17 + $0x20] sm:$0xff]
    %v1059 = vld [vmem:[#allocation17 + $0x28] sm:$0xff]
    %v1060 = vld [vmem:[#allocation17 + $0x30] sm:$0xff]
    %v1061 = vld [vmem:[#allocation17 + $0x38] sm:$0xff]
    %v1062 = vld [vmem:[#allocation17 + $0x40] sm:$0xff]
    %v1063 = vld [vmem:[#allocation17 + $0x48] sm:$0xff]
    %v1064 = vld [vmem:[#allocation17 + $0x50] sm:$0xff]
    %v1065 = vld [vmem:[#allocation17 + $0x58] sm:$0xff]
    %v1066 = vld [vmem:[#allocation17 + $0x60] sm:$0xff]
    %v1067 = vld [vmem:[#allocation17 + $0x68] sm:$0xff]
    %v1068 = vld [vmem:[#allocation17 + $0x70] sm:$0xff]
    %v1069 = vld [vmem:[#allocation17 + $0x78] sm:$0xff]
    %v1070 = vld [vmem:[%s20] sm:$0x1]
    %v1072 = vlaneseq
    %v1073 = vshrl.u32 %v1072, 7
    %v1074 = vsub.s32 0, %v1073
    %v1075 = vrot.slane %v1070, %v1074
    %1077 = vmatprep.subr.mxu0 0.0
    %1078 = vmatpush1.msra.mxu0 %v1054
    %1079 = vmatprep.subr.mxu0 0.0
    %1080 = vmatpush1.msra.mxu0 %v1055
    %1081 = vmatprep.subr.mxu0 0.0
    %1082 = vmatpush1.msra.mxu0 %v1056
    %1083 = vmatprep.subr.mxu0 0.0
    %1084 = vmatpush1.msra.mxu0 %v1057
    %1085 = vmatprep.subr.mxu0 0.0
    %1086 = vmatpush1.msra.mxu0 %v1058
    %1087 = vmatprep.subr.mxu0 0.0
    %1088 = vmatpush1.msra.mxu0 %v1059
    %1089 = vmatprep.subr.mxu0 0.0
    %1090 = vmatpush1.msra.mxu0 %v1060
    %1091 = vmatprep.subr.mxu0 0.0
    %1092 = vmatpush1.msra.mxu0 %v1061
    %1093 = vmatprep.subr.mxu0 0.0
    %1094 = vmatpush1.msra.mxu0 %v1062
    %1095 = vmatprep.subr.mxu0 0.0
    %1096 = vmatpush1.msra.mxu0 %v1063
    %1097 = vmatprep.subr.mxu0 0.0
    %1098 = vmatpush1.msra.mxu0 %v1064
    %1099 = vmatprep.subr.mxu0 0.0
    %1100 = vmatpush1.msra.mxu0 %v1065
    %1101 = vmatprep.subr.mxu0 0.0
    %1102 = vmatpush1.msra.mxu0 %v1066
    %1103 = vmatprep.subr.mxu0 0.0
    %1104 = vmatpush1.msra.mxu0 %v1067
    %1105 = vmatprep.subr.mxu0 0.0
    %1106 = vmatpush1.msra.mxu0 %v1068
    %1107 = vmatprep.subr.mxu0 0.0
    %1108 = vmatpush1.msra.mxu0 %v1069
    %1109 = vmatprep.subr.mxu0 0.0
    %1110 = vmatpush1.msra.mxu0 0.0
    %1111 = vmatprep.subr.mxu0 0.0
    %1112 = vmatpush1.msra.mxu0 0.0
    %1113 = vmatprep.subr.mxu0 0.0
    %1114 = vmatpush1.msra.mxu0 0.0
    %1115 = vmatprep.subr.mxu0 0.0
    %1116 = vmatpush1.msra.mxu0 0.0
    %1117 = vmatprep.subr.mxu0 0.0
    %1118 = vmatpush1.msra.mxu0 0.0
    %1119 = vmatprep.subr.mxu0 0.0
    %1120 = vmatpush1.msra.mxu0 0.0
    %1121 = vmatprep.subr.mxu0 0.0
    %1122 = vmatpush1.msra.mxu0 0.0
    %1123 = vmatprep.subr.mxu0 0.0
    %1124 = vmatpush1.msra.mxu0 0.0
    %1125 = vmatprep.subr.mxu0 0.0
    %1126 = vmatpush1.msra.mxu0 0.0
    %1127 = vmatprep.subr.mxu0 0.0
    %1128 = vmatpush1.msra.mxu0 0.0
    %1129 = vmatprep.subr.mxu0 0.0
    %1130 = vmatpush1.msra.mxu0 0.0
    %1131 = vmatprep.subr.mxu0 0.0
    %1132 = vmatpush1.msra.mxu0 0.0
    %1133 = vmatprep.subr.mxu0 0.0
    %1134 = vmatpush1.msra.mxu0 0.0
    %1135 = vmatprep.subr.mxu0 0.0
    %1136 = vmatpush1.msra.mxu0 0.0
    %1137 = vmatprep.subr.mxu0 0.0
    %1138 = vmatpush1.msra.mxu0 0.0
    %1139 = vmatprep.subr.mxu0 0.0
    %1140 = vmatpush1.msra.mxu0 0.0
    %1141 = vmatprep.mubr.f32.mxu0 0.0
    %1142 = vmatmul.mubr.f32.gmra.mrb[0].mxu0 %v1053
    %v1143 = vpop.f32.mrb[0].mxu0
    %v1144 = vadd.f32 %v1075, %v1143
    %v1145 = vpop.f32.mrb[0].mxu0
    %1146 = vdwg.mxu0
    %1147 = vst [vmem:[#allocation19] sm:$0xff] %v1144
    // Predicated region
    $region126: #{autoencoder_forward.1} parent=1 // pred_check
      _
    $region127: #{autoencoder_forward.1} parent=1 // pred_check_branch
      %1149 = sbr.rel (0) target = $region129
    $region128: #{autoencoder_forward.1} parent=1 // pred_region
      _
    $region129: #{autoencoder_forward.1} parent=1 // pred_fallthru
      _
    // Predicated region
    $region130: #{autoencoder_forward.1} parent=1 // pred_check
      _
    $region131: #{autoencoder_forward.1} parent=1 // pred_check_branch
      %1151 = sbr.rel (0) target = $region133
    $region132: #{autoencoder_forward.1} parent=1 // pred_region
      %s1153 = ssub.s32 128, 128
      %1154 = vsyncadd [#allocation4], %s1153
      %s1156 = sshll.u32 [#allocation19], 4
      %s1157 = int_to_ptr.vmem [resolvable:$true] %s1156
      %1159 = dma.vmem_to_hbm [thread:$0]  %s1157, 128, %s22, [#allocation4]
    $region133: #{autoencoder_forward.1} parent=1 // pred_fallthru
      _
    // Predicated region
    $region134: #{autoencoder_forward.1} parent=1 // pred_check
      _
    $region135: #{autoencoder_forward.1} parent=1 // pred_check_branch
      %1161 = sbr.rel (0) target = $region137
    $region136: #{autoencoder_forward.1} parent=1 // pred_region
      _
    $region137: #{autoencoder_forward.1} parent=1 // pred_fallthru
      _
    // Predicated region
    $region138: #{autoencoder_forward.1} parent=1 // pred_check
      _
    $region139: #{autoencoder_forward.1} parent=1 // pred_check_branch
      %1163 = sbr.rel (0) target = $region141
    $region140: #{autoencoder_forward.1} parent=1 // pred_region
      %1164 = dma.done [#allocation4], 128
    $region141: #{autoencoder_forward.1} parent=1 // pred_fallthru
      _
    %1165 = vsyncpa [#allocation3], 1
    %1166 = vsyncpa [#allocation6], 1
    %1167 = vsyncpa [#allocation9], 1
    %1168 = vsyncpa [#allocation12], 1
    %1169 = vsyncpa [#allocation15], 1
    %1170 = vsyncpa [#allocation18], 1
    %1171 = vsyncpa [#allocation4], 1

</llo_original>
